<compile_context>
chip_gen: v6e
topology: v6e:2x2x1
jax: 0.10.0
libtpu: 0.0.40
codegen_flags: <defaults>
</compile_context>

<pallas_src>
import functools

import jax
import jax.numpy as jnp
from jax import lax
from jax.experimental import pallas as pl
from jax.experimental.pallas import tpu as pltpu

BN_EPS = 1e-5
_VMEM_LIMIT = 48 * 1024 * 1024


# ---------------------------------------------------------------------------
# Pass 1: per-parity conv matmul + per-channel sum / sumsq, folded into a
# single BN(+dropout-scale) (scale, shift) pair on the last grid step.
# ---------------------------------------------------------------------------
def _conv_stats_kernel(p_ref, w_ref, g_ref, b_ref, conv_ref, stats_ref, acc_ref,
                       *, inv_m, drop_scale):
    par = pl.program_id(0)
    i = pl.program_id(1)

    @pl.when((par == 0) & (i == 0))
    def _():
        acc_ref[...] = jnp.zeros_like(acc_ref)

    # bf16 x bf16 -> f32 accumulation on the MXU.  No conv bias: it is
    # cancelled exactly by train-mode BatchNorm mean subtraction.
    conv = jnp.dot(p_ref[...], w_ref[...], preferred_element_type=jnp.float32)
    conv_ref[...] = conv.astype(conv_ref.dtype)          # bf16 slab to HBM

    # Stats from the f32 value (before the bf16 cast); sliced accumulates
    # avoid the per-step sublane concat/copy.
    acc_ref[0:1, :] += jnp.sum(conv, axis=0, keepdims=True)
    acc_ref[1:2, :] += jnp.sum(conv * conv, axis=0, keepdims=True)

    # Finalize on the last (parity, tile) step: fold BN affine and the
    # inverted-dropout 1/(1-p) scale into one per-channel FMA.
    @pl.when((par == pl.num_programs(0) - 1) & (i == pl.num_programs(1) - 1))
    def _():
        mean = acc_ref[0:1, :] * inv_m
        var = jnp.maximum(acc_ref[1:2, :] * inv_m - mean * mean, 0.0)
        s = g_ref[...] * lax.rsqrt(var + BN_EPS)
        stats_ref[0:1, :] = s * drop_scale
        stats_ref[1:2, :] = (b_ref[...] - mean * s) * drop_scale


# ---------------------------------------------------------------------------
# Pass 2: fused BN FMA + dropout keep-mask + ReLU ("parallel" over row tiles).
# ---------------------------------------------------------------------------
def _bn_drop_relu_kernel(conv_ref, stats_ref, mask_ref, o_ref):
    scale = stats_ref[0:1, :]
    shift = stats_ref[1:2, :]
    y = conv_ref[...].astype(jnp.float32) * scale + shift
    y = y * mask_ref[...].astype(jnp.float32)            # drop_scale already folded in
    o_ref[...] = jnp.maximum(y, 0.0).astype(o_ref.dtype)


# ---------------------------------------------------------------------------
# Sub-pixel (output-parity) decomposition of ConvTranspose2d(4x4, s=2, p=1).
# Output pixel (2j+p_h, 2k+p_w) = patches[p][n*H*W + j*W + k] @ weights[p],
# with p = 2*p_h + p_w, K = 4*Cin (no structural zeros).
# ---------------------------------------------------------------------------
def _subpixel_patches_and_weights(x, weight):
    N, Cin, H, W = x.shape
    _, Cout, _, _ = weight.shape
    # ConvT taps touched per parity (from oh = 2*ih - 1 + k_tap, padding=1):
    #   even output rows use taps {3,1} on x[j-1], x[j];
    #   odd  output rows use taps {2,0} on x[j],  x[j+1].   (same for columns)
    taps = ((3, 1), (2, 0))
    patches, weights = [], []
    for p_h in range(2):
        for p_w in range(2):
            pad_h = (1 - p_h, p_h)          # even parity: zero row above; odd: below
            pad_w = (1 - p_w, p_w)
            xp = jnp.pad(x, ((0, 0), (0, 0), pad_h, pad_w))       # [N,Cin,H+1,W+1]
            cols = jnp.stack([xp[:, :, a:a + H, b:b + W]
                              for a in range(2) for b in range(2)], axis=0)
            cols = cols.reshape(2, 2, N, Cin, H, W)
            cols = cols.transpose(2, 4, 5, 3, 0, 1).reshape(N * H * W, Cin * 4)
            patches.append(cols)                                  # K order (Cin,a,b)
            wp = jnp.stack([weight[:, :, taps[p_h][a], taps[p_w][b]]
                            for a in range(2) for b in range(2)], axis=0)   # [4,Cin,Cout]
            weights.append(wp.transpose(1, 0, 2).reshape(Cin * 4, Cout))
    return jnp.stack(patches, 0), jnp.stack(weights, 0)           # [4,M,K], [4,K,Cout]


@functools.partial(jax.jit, static_argnames=("kernel_size", "stride", "padding",
                                             "drop_rate", "block_m", "matmul_dtype"))
def pix2pix_decoder_block(x, skip, weight, bias, gamma, beta, keep_mask,
                          kernel_size=(4, 4), stride=(2, 2), padding=(1, 1),
                          drop_rate=0.5, block_m=256, matmul_dtype=jnp.bfloat16):
    """x: [N, Cin, H, W]; weight: ConvTranspose2d layout [Cin, Cout, kh, kw];
    skip: [N, Cskip, 2H, 2W]; keep_mask: {0,1} float [N, Cout, 2H, 2W].
    Returns NCHW [N, Cout+Cskip, 2H, 2W]."""
    if kernel_size != (4, 4) or stride != (2, 2) or padding != (1, 1):
        raise NotImplementedError(
            "Sub-pixel decomposition specialised to ConvTranspose2d(4x4, s=2, p=1) "
            "(the Pix2Pix_DecoderBlock defaults).")
    N, Cin, H, W = x.shape
    _, Cout, _, _ = weight.shape
    Ho, Wo = 2 * H, 2 * W

    patches, weights = _subpixel_patches_and_weights(x, weight)   # [4,M,K], [4,K,Cout]
    M_par, K = patches.shape[1], patches.shape[2]

    # Lane-dense output channels (multiple of 128); M padded to the tile size.
    Cout_p = max(128, -(-Cout // 128) * 128)
    M_pad = -(-M_par // block_m) * block_m
    n_tiles = M_pad // block_m

    patches_p = jnp.pad(patches, ((0, 0), (0, M_pad - M_par), (0, 0))).astype(matmul_dtype)
    weights_p = jnp.pad(weights, ((0, 0), (0, 0), (0, Cout_p - Cout))).astype(matmul_dtype)
    g2d = jnp.pad(gamma.reshape(1, Cout), ((0, 0), (0, Cout_p - Cout))).astype(jnp.float32)
    b2d = jnp.pad(beta.reshape(1, Cout), ((0, 0), (0, Cout_p - Cout))).astype(jnp.float32)
    del bias  # absorbed exactly by train-mode BatchNorm mean subtraction

    itemsize = jnp.dtype(matmul_dtype).itemsize
    conv_out, stats = pl.pallas_call(
        functools.partial(_conv_stats_kernel,
                          inv_m=1.0 / float(4 * M_par),
                          drop_scale=1.0 / (1.0 - drop_rate)),
        out_shape=(jax.ShapeDtypeStruct((4, M_pad, Cout_p), jnp.bfloat16),
                   jax.ShapeDtypeStruct((2, Cout_p), jnp.float32)),
        grid_spec=pltpu.PrefetchScalarGridSpec(
            num_scalar_prefetch=0,
            grid=(4, n_tiles),                  # parity outer -> weight stays resident
            in_specs=[
                pl.BlockSpec((None, block_m, K), lambda p, i: (p, i, 0)),
                pl.BlockSpec((None, K, Cout_p), lambda p, i: (p, 0, 0)),
                pl.BlockSpec((1, Cout_p), lambda p, i: (0, 0)),
                pl.BlockSpec((1, Cout_p), lambda p, i: (0, 0)),
            ],
            out_specs=(
                pl.BlockSpec((None, block_m, Cout_p), lambda p, i: (p, i, 0)),
                pl.BlockSpec((2, Cout_p), lambda p, i: (0, 0)),
            ),
            scratch_shapes=[pltpu.VMEM((2, Cout_p), jnp.float32)],
        ),
        compiler_params=pltpu.CompilerParams(
            # BN-stat reduction carried across both axes -> sequential.
            dimension_semantics=("arbitrary", "arbitrary"),
            vmem_limit_bytes=_VMEM_LIMIT),
        cost_estimate=pl.CostEstimate(
            flops=2 * 4 * M_pad * K * Cout_p,
            transcendentals=0,
            bytes_accessed=(4 * M_pad * K + 4 * K * Cout_p) * itemsize
                           + 4 * M_pad * Cout_p * 2),
    )(patches_p, weights_p, g2d, b2d)

    # Dropout keep-mask laid out to match the parity-decomposed rows; bf16
    # (0/1 exact) since the 1/(1-p) scale is folded into scale/shift.
    km = keep_mask.reshape(N, Cout, H, 2, W, 2)            # [N,C,j,p_h,k,p_w]
    km = km.transpose(3, 5, 0, 2, 4, 1).reshape(4, M_par, Cout)
    mask4 = jnp.pad(km, ((0, 0), (0, M_pad - M_par), (0, Cout_p - Cout))
                    ).astype(jnp.bfloat16)

    M_total = 4 * M_pad
    block_m2 = 4 * block_m                                  # always divides M_total
    conv_flat = conv_out.reshape(M_total, Cout_p)
    mask_flat = mask4.reshape(M_total, Cout_p)

    out2d = pl.pallas_call(
        _bn_drop_relu_kernel,
        out_shape=jax.ShapeDtypeStruct((M_total, Cout_p), jnp.float32),
        grid_spec=pltpu.PrefetchScalarGridSpec(
            num_scalar_prefetch=0,
            grid=(M_total // block_m2,),
            in_specs=[
                pl.BlockSpec((block_m2, Cout_p), lambda i: (i, 0)),
                pl.BlockSpec((2, Cout_p), lambda i: (0, 0)),
                pl.BlockSpec((block_m2, Cout_p), lambda i: (i, 0)),
            ],
            out_specs=pl.BlockSpec((block_m2, Cout_p), lambda i: (i, 0)),
        ),
        compiler_params=pltpu.CompilerParams(
            dimension_semantics=("parallel",),   # independent tiles -> megacore-shardable
            vmem_limit_bytes=_VMEM_LIMIT),
        cost_estimate=pl.CostEstimate(
            flops=4 * M_total * Cout_p,
            transcendentals=0,
            bytes_accessed=M_total * Cout_p * (2 + 2 + 4) + 2 * Cout_p * 4),
    )(conv_flat, stats, mask_flat)

    # Un-shuffle parity rows back to NCHW (wrapper-side layout op) and fuse
    # the skip path: relu(cat(a, b)) == cat(relu(a), relu(b)).
    dec = out2d.reshape(4, M_pad, Cout_p)[:, :M_par, :Cout]
    dec = dec.reshape(2, 2, N, H, W, Cout).transpose(2, 5, 3, 0, 4, 1)
    dec = dec.reshape(N, Cout, Ho, Wo)
    return jnp.concatenate([dec, jnp.maximum(skip, 0.0)], axis=1)


# ---------------------------------------------------------------------------
# Pure-JAX reference (conv-transpose + train-mode BN + dropout + concat + ReLU)
# ---------------------------------------------------------------------------
def _reference(x, weight, bias, gamma, beta, skip, keep_mask, drop_rate,
               stride=(2, 2), padding=(1, 1)):
    _, _, kh, kw = weight.shape
    w_conv = jnp.flip(weight, (2, 3)).transpose(1, 0, 2, 3)   # [Cout, Cin, kh, kw]
    pad = [(kh - 1 - padding[0],) * 2, (kw - 1 - padding[1],) * 2]
    out = lax.conv_general_dilated(
        x, w_conv, window_strides=(1, 1), padding=pad, lhs_dilation=stride,
        dimension_numbers=("NCHW", "OIHW", "NCHW"),
        precision=lax.Precision.HIGHEST)
    out = out + bias.reshape(1, -1, 1, 1)
    mean = jnp.mean(out, axis=(0, 2, 3), keepdims=True)
    var = jnp.mean((out - mean) ** 2, axis=(0, 2, 3), keepdims=True)
    out = (out - mean) * lax.rsqrt(var + BN_EPS)
    out = out * gamma.reshape(1, -1, 1, 1) + beta.reshape(1, -1, 1, 1)
    out = out * keep_mask / (1.0 - drop_rate)
    out = jnp.concatenate([out, skip], axis=1)
    return jnp.maximum(out, 0.0)


if __name__ == "__main__":
    key = jax.random.PRNGKey(0)
    k_x, k_w, k_b, k_g, k_be, k_s, k_d = jax.random.split(key, 7)

    N, Cin, H, W = 2, 8, 16, 16
    Cout = 16
    Cskip = 16
    Ho, Wo = 2 * H, 2 * W
    drop_rate = 0.5

    x = jax.random.normal(k_x, (N, Cin, H, W), dtype=jnp.float32)
    skip = jax.random.normal(k_s, (N, Cskip, Ho, Wo), dtype=jnp.float32)
    # pix2pix-style init: conv weights N(0, 0.02); PyTorch ConvT weight layout [Cin, Cout, kh, kw].
    weight = 0.02 * jax.random.normal(k_w, (Cin, Cout, 4, 4), dtype=jnp.float32)
    bias = 0.01 * jax.random.normal(k_b, (Cout,), dtype=jnp.float32)
    gamma = 1.0 + 0.02 * jax.random.normal(k_g, (Cout,), dtype=jnp.float32)
    beta = 0.02 * jax.random.normal(k_be, (Cout,), dtype=jnp.float32)
    # Deterministic dropout keep-mask (PyTorch's internal RNG is not reproducible here).
    keep_mask = jax.random.bernoulli(
        k_d, 1.0 - drop_rate, (N, Cout, Ho, Wo)).astype(jnp.float32)

    out = pix2pix_decoder_block(x, skip, weight, bias, gamma, beta, keep_mask,
                                drop_rate=drop_rate)
    out = jax.block_until_ready(out)

    ref = jax.block_until_ready(
        _reference(x, weight, bias, gamma, beta, skip, keep_mask, drop_rate))
    assert out.shape == (N, Cout + Cskip, Ho, Wo), out.shape
    max_err = float(jnp.max(jnp.abs(out - ref)))
    # Kernel runs the matmul and conv slab in bf16 (f32 accumulation), so the
    # tolerance is wider than a pure-f32 comparison; structural errors would be O(1).
    assert jnp.allclose(out, ref, atol=5e-2, rtol=5e-2), max_err

    print("KERNEL_OK")
</pallas_src>

<mosaic_0001>
module attributes {stable_mosaic.version = 11 : i64} {
  func.func @_conv_stats_kernel(%arg0: i32, %arg1: i32, %arg2: memref<1x256x32xbf16, #tpu.memory_space<vmem>>, %arg3: memref<1x32x128xbf16, #tpu.memory_space<vmem>>, %arg4: memref<1x128xf32, #tpu.memory_space<vmem>>, %arg5: memref<1x128xf32, #tpu.memory_space<vmem>>, %arg6: memref<1x256x128xbf16, #tpu.memory_space<vmem>>, %arg7: memref<2x128xf32, #tpu.memory_space<vmem>>, %arg8: memref<2x128xf32, #tpu.memory_space<vmem>>) attributes {dimension_semantics = [#tpu.dimension_semantics<arbitrary>, #tpu.dimension_semantics<arbitrary>], iteration_bounds = array<i64: 4, 2>, scalar_prefetch = 0 : i64, scratch_operands = 1 : i64, tpu.core_type = #tpu.core_type<tc>, window_params = [{transform_indices = @transform_0, window_bounds = array<i64: 1, 256, 32>}, {transform_indices = @transform_1, window_bounds = array<i64: 1, 32, 128>}, {pipeline_mode = #tpu.pipeline_mode<synchronous>, transform_indices = @transform_2, window_bounds = array<i64: 1, 128>}, {pipeline_mode = #tpu.pipeline_mode<synchronous>, transform_indices = @transform_3, window_bounds = array<i64: 1, 128>}, {transform_indices = @transform_4, window_bounds = array<i64: 1, 256, 128>}, {pipeline_mode = #tpu.pipeline_mode<synchronous>, transform_indices = @transform_5, window_bounds = array<i64: 2, 128>}]} {
    %c0_i32 = arith.constant 0 : i32
    %0 = arith.cmpi eq, %arg0, %c0_i32 : i32
    %c0_i32_0 = arith.constant 0 : i32
    %1 = arith.cmpi eq, %arg1, %c0_i32_0 : i32
    %2 = arith.andi %0, %1 : i1
    %3 = arith.extui %2 : i1 to i32
    %c0_i32_1 = arith.constant 0 : i32
    %4 = arith.cmpi ne, %3, %c0_i32_1 : i32
    scf.if %4 {
      %cst_20 = arith.constant 0.000000e+00 : f32
      %30 = vector.broadcast %cst_20 : f32 to vector<2x128xf32>
      %c0_21 = arith.constant 0 : index
      %c0_22 = arith.constant 0 : index
      %31 = vector.load %arg8[%c0_21, %c0_22] : memref<2x128xf32, #tpu.memory_space<vmem>>, vector<2x128xf32>
      tpu.vector_store %arg8[%c0_21, %c0_22], %30 {strides = array<i32>} : memref<2x128xf32, #tpu.memory_space<vmem>>, vector<2x128xf32>,
    } else {
    }
    %c0 = arith.constant 0 : index
    %c0_2 = arith.constant 0 : index
    %c0_3 = arith.constant 0 : index
    %5 = vector.load %arg2[%c0, %c0_2, %c0_3] : memref<1x256x32xbf16, #tpu.memory_space<vmem>>, vector<1x256x32xbf16>
    %6 = vector.shape_cast %5 : vector<1x256x32xbf16> to vector<256x32xbf16>
    %c0_4 = arith.constant 0 : index
    %c0_5 = arith.constant 0 : index
    %c0_6 = arith.constant 0 : index
    %7 = vector.load %arg3[%c0_4, %c0_5, %c0_6] : memref<1x32x128xbf16, #tpu.memory_space<vmem>>, vector<1x32x128xbf16>
    %8 = vector.shape_cast %7 : vector<1x32x128xbf16> to vector<32x128xbf16>
    %cst = arith.constant dense<0.000000e+00> : vector<256x128xf32>
    %9 = tpu.matmul %6, %8, %cst {dimension_numbers = #tpu.dot_dimension_numbers<[1], [0], [0], [1], [0, 0, 1, 1], [], []>} : vector<256x32xbf16>, vector<32x128xbf16>, vector<256x128xf32> -> vector<256x128xf32>
    %10 = arith.truncf %9 : vector<256x128xf32> to vector<256x128xbf16>
    %c0_7 = arith.constant 0 : index
    %c0_8 = arith.constant 0 : index
    %c0_9 = arith.constant 0 : index
    %11 = vector.load %arg6[%c0_7, %c0_8, %c0_9] : memref<1x256x128xbf16, #tpu.memory_space<vmem>>, vector<1x256x128xbf16>
    %12 = vector.shape_cast %11 : vector<1x256x128xbf16> to vector<256x128xbf16>
    %13 = vector.shape_cast %10 : vector<256x128xbf16> to vector<1x256x128xbf16>
    tpu.vector_store %arg6[%c0_7, %c0_8, %c0_9], %13 {strides = array<i32>} : memref<1x256x128xbf16, #tpu.memory_space<vmem>>, vector<1x256x128xbf16>,
    %c0_10 = arith.constant 0 : index
    %c0_11 = arith.constant 0 : index
    %14 = vector.load %arg8[%c0_10, %c0_11] : memref<2x128xf32, #tpu.memory_space<vmem>>, vector<1x128xf32>
    %cst_12 = arith.constant dense<0.000000e+00> : vector<128xf32>
    %15 = vector.multi_reduction <add>, %9, %cst_12 [0] : vector<256x128xf32> to vector<128xf32>
    %16 = vector.shape_cast %15 : vector<128xf32> to vector<1x128xf32>
    %17 = arith.addf %14, %16 : vector<1x128xf32>
    %c0_13 = arith.constant 0 : index
    %c0_14 = arith.constant 0 : index
    %18 = vector.load %arg8[%c0_13, %c0_14] : memref<2x128xf32, #tpu.memory_space<vmem>>, vector<1x128xf32>
    tpu.vector_store %arg8[%c0_13, %c0_14], %17 {strides = array<i32>} : memref<2x128xf32, #tpu.memory_space<vmem>>, vector<1x128xf32>,
    %c1 = arith.constant 1 : index
    %c0_15 = arith.constant 0 : index
    %19 = vector.load %arg8[%c1, %c0_15] : memref<2x128xf32, #tpu.memory_space<vmem>>, vector<1x128xf32>
    %20 = arith.mulf %9, %9 : vector<256x128xf32>
    %cst_16 = arith.constant dense<0.000000e+00> : vector<128xf32>
    %21 = vector.multi_reduction <add>, %20, %cst_16 [0] : vector<256x128xf32> to vector<128xf32>
    %22 = vector.shape_cast %21 : vector<128xf32> to vector<1x128xf32>
    %23 = arith.addf %19, %22 : vector<1x128xf32>
    %c1_17 = arith.constant 1 : index
    %c0_18 = arith.constant 0 : index
    %24 = vector.load %arg8[%c1_17, %c0_18] : memref<2x128xf32, #tpu.memory_space<vmem>>, vector<1x128xf32>
    tpu.vector_store %arg8[%c1_17, %c0_18], %23 {strides = array<i32>} : memref<2x128xf32, #tpu.memory_space<vmem>>, vector<1x128xf32>,
    %c3_i32 = arith.constant 3 : i32
    %25 = arith.cmpi eq, %arg0, %c3_i32 : i32
    %c1_i32 = arith.constant 1 : i32
    %26 = arith.cmpi eq, %arg1, %c1_i32 : i32
    %27 = arith.andi %25, %26 : i1
    %28 = arith.extui %27 : i1 to i32
    %c0_i32_19 = arith.constant 0 : i32
    %29 = arith.cmpi ne, %28, %c0_i32_19 : i32
    scf.if %29 {
      %c0_20 = arith.constant 0 : index
      %c0_21 = arith.constant 0 : index
      %30 = vector.load %arg8[%c0_20, %c0_21] : memref<2x128xf32, #tpu.memory_space<vmem>>, vector<1x128xf32>
      %cst_22 = arith.constant 4.8828125E-4 : f32
      %31 = vector.broadcast %cst_22 : f32 to vector<1x128xf32>
      %32 = arith.mulf %30, %31 : vector<1x128xf32>
      %c1_23 = arith.constant 1 : index
      %c0_24 = arith.constant 0 : index
      %33 = vector.load %arg8[%c1_23, %c0_24] : memref<2x128xf32, #tpu.memory_space<vmem>>, vector<1x128xf32>
      %cst_25 = arith.constant 4.8828125E-4 : f32
      %34 = vector.broadcast %cst_25 : f32 to vector<1x128xf32>
      %35 = arith.mulf %33, %34 : vector<1x128xf32>
      %36 = arith.mulf %32, %32 : vector<1x128xf32>
      %37 = arith.subf %35, %36 : vector<1x128xf32>
      %cst_26 = arith.constant 0.000000e+00 : f32
      %38 = vector.broadcast %cst_26 : f32 to vector<1x128xf32>
      %39 = arith.maximumf %37, %38 : vector<1x128xf32>
      %c0_27 = arith.constant 0 : index
      %c0_28 = arith.constant 0 : index
      %40 = vector.load %arg4[%c0_27, %c0_28] : memref<1x128xf32, #tpu.memory_space<vmem>>, vector<1x128xf32>
      %cst_29 = arith.constant 9.99999974E-6 : f32
      %41 = vector.broadcast %cst_29 : f32 to vector<1x128xf32>
      %42 = arith.addf %39, %41 : vector<1x128xf32>
      %43 = math.rsqrt %42 : vector<1x128xf32>
      %44 = arith.mulf %40, %43 : vector<1x128xf32>
      %cst_30 = arith.constant 2.000000e+00 : f32
      %45 = vector.broadcast %cst_30 : f32 to vector<1x128xf32>
      %46 = arith.mulf %44, %45 : vector<1x128xf32>
      %c0_31 = arith.constant 0 : index
      %c0_32 = arith.constant 0 : index
      %47 = vector.load %arg7[%c0_31, %c0_32] : memref<2x128xf32, #tpu.memory_space<vmem>>, vector<1x128xf32>
      tpu.vector_store %arg7[%c0_31, %c0_32], %46 {strides = array<i32>} : memref<2x128xf32, #tpu.memory_space<vmem>>, vector<1x128xf32>,
      %c0_33 = arith.constant 0 : index
      %c0_34 = arith.constant 0 : index
      %48 = vector.load %arg5[%c0_33, %c0_34] : memref<1x128xf32, #tpu.memory_space<vmem>>, vector<1x128xf32>
      %49 = arith.mulf %32, %44 : vector<1x128xf32>
      %50 = arith.subf %48, %49 : vector<1x128xf32>
      %cst_35 = arith.constant 2.000000e+00 : f32
      %51 = vector.broadcast %cst_35 : f32 to vector<1x128xf32>
      %52 = arith.mulf %50, %51 : vector<1x128xf32>
      %c1_36 = arith.constant 1 : index
      %c0_37 = arith.constant 0 : index
      %53 = vector.load %arg7[%c1_36, %c0_37] : memref<2x128xf32, #tpu.memory_space<vmem>>, vector<1x128xf32>
      tpu.vector_store %arg7[%c1_36, %c0_37], %52 {strides = array<i32>} : memref<2x128xf32, #tpu.memory_space<vmem>>, vector<1x128xf32>,
    } else {
    }
    return
  }
  func.func @transform_0(%arg0: i32, %arg1: i32) -> (i32, i32, i32) {
    %c0_i32 = arith.constant 0 : i32
    %c0_i32_0 = arith.constant 0 : i32
    return %arg0, %arg1, %c0_i32 : i32, i32, i32
  }
  func.func @transform_1(%arg0: i32, %arg1: i32) -> (i32, i32, i32) {
    %c0_i32 = arith.constant 0 : i32
    %c0_i32_0 = arith.constant 0 : i32
    %c0_i32_1 = arith.constant 0 : i32
    return %arg0, %c0_i32, %c0_i32_0 : i32, i32, i32
  }
  func.func @transform_2(%arg0: i32, %arg1: i32) -> (i32, i32) {
    %c0_i32 = arith.constant 0 : i32
    %c0_i32_0 = arith.constant 0 : i32
    %c0_i32_1 = arith.constant 0 : i32
    return %c0_i32, %c0_i32_0 : i32, i32
  }
  func.func @transform_3(%arg0: i32, %arg1: i32) -> (i32, i32) {
    %c0_i32 = arith.constant 0 : i32
    %c0_i32_0 = arith.constant 0 : i32
    %c0_i32_1 = arith.constant 0 : i32
    return %c0_i32, %c0_i32_0 : i32, i32
  }
  func.func @transform_4(%arg0: i32, %arg1: i32) -> (i32, i32, i32) {
    %c0_i32 = arith.constant 0 : i32
    %c0_i32_0 = arith.constant 0 : i32
    return %arg0, %arg1, %c0_i32 : i32, i32, i32
  }
  func.func @transform_5(%arg0: i32, %arg1: i32) -> (i32, i32) {
    %c0_i32 = arith.constant 0 : i32
    %c0_i32_0 = arith.constant 0 : i32
    %c0_i32_1 = arith.constant 0 : i32
    return %c0_i32, %c0_i32_0 : i32, i32
  }
}

module attributes {stable_mosaic.version = 11 : i64} {
  func.func @_bn_drop_relu_kernel(%arg0: i32, %arg1: memref<1024x128xbf16, #tpu.memory_space<vmem>>, %arg2: memref<2x128xf32, #tpu.memory_space<vmem>>, %arg3: memref<1024x128xbf16, #tpu.memory_space<vmem>>, %arg4: memref<1024x128xf32, #tpu.memory_space<vmem>>) attributes {dimension_semantics = [#tpu.dimension_semantics<parallel>], iteration_bounds = array<i64: 2>, scalar_prefetch = 0 : i64, scratch_operands = 0 : i64, tpu.core_type = #tpu.core_type<tc>, window_params = [{transform_indices = @transform_0, window_bounds = array<i64: 1024, 128>}, {pipeline_mode = #tpu.pipeline_mode<synchronous>, transform_indices = @transform_1, window_bounds = array<i64: 2, 128>}, {transform_indices = @transform_2, window_bounds = array<i64: 1024, 128>}, {transform_indices = @transform_3, window_bounds = array<i64: 1024, 128>}]} {
    %c0 = arith.constant 0 : index
    %c0_0 = arith.constant 0 : index
    %0 = vector.load %arg2[%c0, %c0_0] : memref<2x128xf32, #tpu.memory_space<vmem>>, vector<1x128xf32>
    %c1 = arith.constant 1 : index
    %c0_1 = arith.constant 0 : index
    %1 = vector.load %arg2[%c1, %c0_1] : memref<2x128xf32, #tpu.memory_space<vmem>>, vector<1x128xf32>
    %c0_2 = arith.constant 0 : index
    %c0_3 = arith.constant 0 : index
    %2 = vector.load %arg1[%c0_2, %c0_3] : memref<1024x128xbf16, #tpu.memory_space<vmem>>, vector<1024x128xbf16>
    %3 = arith.extf %2 : vector<1024x128xbf16> to vector<1024x128xf32>
    %4 = vector.broadcast %0 : vector<1x128xf32> to vector<1024x128xf32>
    %5 = arith.mulf %3, %4 : vector<1024x128xf32>
    %6 = vector.broadcast %1 : vector<1x128xf32> to vector<1024x128xf32>
    %7 = arith.addf %5, %6 : vector<1024x128xf32>
    %c0_4 = arith.constant 0 : index
    %c0_5 = arith.constant 0 : index
    %8 = vector.load %arg3[%c0_4, %c0_5] : memref<1024x128xbf16, #tpu.memory_space<vmem>>, vector<1024x128xbf16>
    %9 = arith.extf %8 : vector<1024x128xbf16> to vector<1024x128xf32>
    %10 = arith.mulf %7, %9 : vector<1024x128xf32>
    %cst = arith.constant 0.000000e+00 : f32
    %11 = vector.broadcast %cst : f32 to vector<1024x128xf32>
    %12 = arith.maximumf %10, %11 : vector<1024x128xf32>
    %c0_6 = arith.constant 0 : index
    %c0_7 = arith.constant 0 : index
    %13 = vector.load %arg4[%c0_6, %c0_7] : memref<1024x128xf32, #tpu.memory_space<vmem>>, vector<1024x128xf32>
    tpu.vector_store %arg4[%c0_6, %c0_7], %12 {strides = array<i32>} : memref<1024x128xf32, #tpu.memory_space<vmem>>, vector<1024x128xf32>,
    return
  }
  func.func @transform_0(%arg0: i32) -> (i32, i32) {
    %c0_i32 = arith.constant 0 : i32
    %c0_i32_0 = arith.constant 0 : i32
    return %arg0, %c0_i32 : i32, i32
  }
  func.func @transform_1(%arg0: i32) -> (i32, i32) {
    %c0_i32 = arith.constant 0 : i32
    %c0_i32_0 = arith.constant 0 : i32
    %c0_i32_1 = arith.constant 0 : i32
    return %c0_i32, %c0_i32_0 : i32, i32
  }
  func.func @transform_2(%arg0: i32) -> (i32, i32) {
    %c0_i32 = arith.constant 0 : i32
    %c0_i32_0 = arith.constant 0 : i32
    return %arg0, %c0_i32 : i32, i32
  }
  func.func @transform_3(%arg0: i32) -> (i32, i32) {
    %c0_i32 = arith.constant 0 : i32
    %c0_i32_0 = arith.constant 0 : i32
    return %arg0, %c0_i32 : i32, i32
  }
}

</mosaic_0001>

<llo_original>
// kernel: pix2pix_decoder_block.2
$region0: #{pix2pix_decoder_block.2}
  #allocation0 [shape = 'u32[]', space=smem, size = 0x4, offset = 0x4, fixed_abs, tag = 'smem constant byte address 0x4 - core index']
  #allocation1 [shape = 'u32[144,128]{1,0:T(1,128)}', space=vmem, size = 0x12000, scoped, tag = 'internal scratch']
  #allocation2 [shape = 'f32[2,128]{1,0:T(2,128)}', space=vmem, size = 0x400, scoped, tag = 'scratch operand']
  %s0 = inlined_call_operand.vmem [shape: bf16[4,512,32], index: 0, kind: input, shape index: {}]
  %s1 = inlined_call_operand.vmem [shape: bf16[4,32,128], index: 1, kind: input, shape index: {}]
  %s2 = inlined_call_operand.vmem [shape: f32[1,128], index: 2, kind: input, shape index: {}]
  %s3 = inlined_call_operand.vmem [shape: f32[1,128], index: 3, kind: input, shape index: {}]
  %s4 = inlined_call_operand.vmem [shape: bf16[4,512,128], index: 4, kind: output, shape index: {0}]
  %s5 = inlined_call_operand.vmem [shape: f32[2,128], index: 5, kind: output, shape index: {1}]
  %6 = xla_tuple %s4, %s5
  %s7 = sld [smem:[#allocation0]]
  $region65: #{pix2pix_decoder_block.2} parent=0
    _
  %s9 = ssub.s32 1, %s7
  %s10 = scalar_select 0, %s9, %s7
  loop: start=0, step=1, limit=10
  $region2: #{pix2pix_decoder_block.2} parent=0 // loop_pre_header
    _
  $region3: #{pix2pix_decoder_block.2} parent=0 // loop_header
    %s12 = sphi 0, %s16
    %p13 = scmp.ge.s32.totalorder %s12, 10
    %s19 = sphi 0, %s31
    %s20 = sphi 0, %s27
    %s21 = sphi 0, %s19
    %s22 = sphi 0, %s20
    %s23 = sphi 0, %s21
    %s24 = sphi 0, %s22
    %s36 = sphi 0, %s38
    %s39 = sphi 0, %s36
    %s40 = sphi 0, %s39
    %s56 = sphi 0, %s40
    %s62 = sphi 0, %s64
    %s65 = sphi 0, %s62
    %s66 = sphi 0, %s65
    %s82 = sphi 0, %s66
    %s86 = sphi 0, %s86
    %s88 = sphi 0, %s86
    %s89 = sphi 0, %s88
    %s103 = sphi 0, %s89
    %s107 = sphi 0, %s107
    %s109 = sphi 0, %s107
    %s110 = sphi 0, %s109
    %s124 = sphi 0, %s110
    %s132 = sphi 0, %s134
    %s135 = sphi 0, %s132
    %s136 = sphi 0, %s135
    %s152 = sphi 0, %s136
    %s156 = sphi 0, %s156
    %s158 = sphi 0, %s156
    %s159 = sphi 0, %s158
    %s173 = sphi 0, %s159
  $region4: #{pix2pix_decoder_block.2} parent=0 // loop_header_branch
    %15 = sbr.rel (%p13) target = $region8
  $region5: #{pix2pix_decoder_block.2} parent=0 // loop_body
    %s17 = ssub.s32 %s12, 1
    %s18 = ssub.s32 %s12, 2
    %s25 = sadd.s32 1, %s20
    %p26 = scmp.ge.s32.totalorder %s25, 2
    %s27 = scalar_select %p26, 0, %s25
    %s28 = sadd.s32 1, %s19
    %s29 = scalar_select %p26, %s28, %s19
    %p30 = scmp.ge.s32.totalorder %s29, 4
    %s31 = scalar_select %p30, 0, %s29
    %s32 = ssub.s32 %s19, %s31
    %s33 = ssub.s32 %s20, %s27
    %s34 = sor.u32 %s32, %s33
    %p35 = scmp.eq.s32.totalorder %s34, 0
    %s37 = sadd.s32 %s36, 1
    %s38 = scalar_select %p35, %s36, %s37
    %p41 = pneg %p35
    %p42 = scmp.eq.s32.totalorder %s12, 7
    %p43 = por %p41, %p42
    %p44 = scmp.ne.s32.totalorder %s36, %s39
    %p45 = scmp.eq.s32.totalorder %s12, 0
    %p46 = por %p44, %p45
    %p47 = scmp.ne.s32.totalorder %s36, %s39
    %p48 = scmp.eq.s32.totalorder %s17, 7
    %p49 = por %p47, %p48
    %p50 = scmp.ne.s32.totalorder %s39, %s40
    %p51 = scmp.eq.s32.totalorder %s17, 0
    %p52 = por %p50, %p51
    %p53 = scmp.ne.s32.totalorder %s39, %s40
    %p54 = scmp.eq.s32.totalorder %s18, 7
    %p55 = por %p53, %p54
    %p57 = scmp.ne.s32.totalorder %s40, %s56
    %p58 = scmp.eq.s32.totalorder %s18, 0
    %p59 = por %p57, %p58
    %s60 = ssub.s32 %s19, %s31
    %p61 = scmp.eq.s32.totalorder %s60, 0
    %s63 = sadd.s32 %s62, 1
    %s64 = scalar_select %p61, %s62, %s63
    %p67 = pneg %p61
    %p68 = scmp.eq.s32.totalorder %s12, 7
    %p69 = por %p67, %p68
    %p70 = scmp.ne.s32.totalorder %s62, %s65
    %p71 = scmp.eq.s32.totalorder %s12, 0
    %p72 = por %p70, %p71
    %p73 = scmp.ne.s32.totalorder %s62, %s65
    %p74 = scmp.eq.s32.totalorder %s17, 7
    %p75 = por %p73, %p74
    %p76 = scmp.ne.s32.totalorder %s65, %s66
    %p77 = scmp.eq.s32.totalorder %s17, 0
    %p78 = por %p76, %p77
    %p79 = scmp.ne.s32.totalorder %s65, %s66
    %p80 = scmp.eq.s32.totalorder %s18, 7
    %p81 = por %p79, %p80
    %p83 = scmp.ne.s32.totalorder %s66, %s82
    %p84 = scmp.eq.s32.totalorder %s18, 0
    %p85 = por %p83, %p84
    %s87 = sadd.s32 %s86, 1
    %p90 = scmp.eq.s32.totalorder %s12, 7
    %p91 = scmp.ne.s32.totalorder %s86, %s88
    %p92 = scmp.eq.s32.totalorder %s12, 0
    %p93 = por %p91, %p92
    %p94 = scmp.ne.s32.totalorder %s86, %s88
    %p95 = scmp.eq.s32.totalorder %s17, 7
    %p96 = por %p94, %p95
    %p97 = scmp.ne.s32.totalorder %s88, %s89
    %p98 = scmp.eq.s32.totalorder %s17, 0
    %p99 = por %p97, %p98
    %p100 = scmp.ne.s32.totalorder %s88, %s89
    %p101 = scmp.eq.s32.totalorder %s18, 7
    %p102 = por %p100, %p101
    %p104 = scmp.ne.s32.totalorder %s89, %s103
    %p105 = scmp.eq.s32.totalorder %s18, 0
    %p106 = por %p104, %p105
    %s108 = sadd.s32 %s107, 1
    %p111 = scmp.eq.s32.totalorder %s12, 7
    %p112 = scmp.ne.s32.totalorder %s107, %s109
    %p113 = scmp.eq.s32.totalorder %s12, 0
    %p114 = por %p112, %p113
    %p115 = scmp.ne.s32.totalorder %s107, %s109
    %p116 = scmp.eq.s32.totalorder %s17, 7
    %p117 = por %p115, %p116
    %p118 = scmp.ne.s32.totalorder %s109, %s110
    %p119 = scmp.eq.s32.totalorder %s17, 0
    %p120 = por %p118, %p119
    %p121 = scmp.ne.s32.totalorder %s109, %s110
    %p122 = scmp.eq.s32.totalorder %s18, 7
    %p123 = por %p121, %p122
    %p125 = scmp.ne.s32.totalorder %s110, %s124
    %p126 = scmp.eq.s32.totalorder %s18, 0
    %p127 = por %p125, %p126
    %s128 = ssub.s32 %s19, %s31
    %s129 = ssub.s32 %s20, %s27
    %s130 = sor.u32 %s128, %s129
    %p131 = scmp.eq.s32.totalorder %s130, 0
    %s133 = sadd.s32 %s132, 1
    %s134 = scalar_select %p131, %s132, %s133
    %p137 = pneg %p131
    %p138 = scmp.eq.s32.totalorder %s12, 7
    %p139 = por %p137, %p138
    %p140 = scmp.ne.s32.totalorder %s132, %s135
    %p141 = scmp.eq.s32.totalorder %s12, 0
    %p142 = por %p140, %p141
    %p143 = scmp.ne.s32.totalorder %s132, %s135
    %p144 = scmp.eq.s32.totalorder %s17, 7
    %p145 = por %p143, %p144
    %p146 = scmp.ne.s32.totalorder %s135, %s136
    %p147 = scmp.eq.s32.totalorder %s17, 0
    %p148 = por %p146, %p147
    %p149 = scmp.ne.s32.totalorder %s135, %s136
    %p150 = scmp.eq.s32.totalorder %s18, 7
    %p151 = por %p149, %p150
    %p153 = scmp.ne.s32.totalorder %s136, %s152
    %p154 = scmp.eq.s32.totalorder %s18, 0
    %p155 = por %p153, %p154
    %s157 = sadd.s32 %s156, 1
    %p160 = scmp.eq.s32.totalorder %s12, 7
    %p161 = scmp.ne.s32.totalorder %s156, %s158
    %p162 = scmp.eq.s32.totalorder %s12, 0
    %p163 = por %p161, %p162
    %p164 = scmp.ne.s32.totalorder %s156, %s158
    %p165 = scmp.eq.s32.totalorder %s17, 7
    %p166 = por %p164, %p165
    %p167 = scmp.ne.s32.totalorder %s158, %s159
    %p168 = scmp.eq.s32.totalorder %s17, 0
    %p169 = por %p167, %p168
    %p170 = scmp.ne.s32.totalorder %s158, %s159
    %p171 = scmp.eq.s32.totalorder %s18, 7
    %p172 = por %p170, %p171
    %p174 = scmp.ne.s32.totalorder %s159, %s173
    %p175 = scmp.eq.s32.totalorder %s18, 0
    %p176 = por %p174, %p175
    %p177 = scmp.le.s32.totalorder 1, %s12
    %p178 = scmp.lt.s32.totalorder %s12, 9
    %p179 = pnand %p177, %p178
    %p180 = pneg %p179
    // Predicated region
    $region9: #{pix2pix_decoder_block.2} parent=5 // pred_check
      _
    $region10: #{pix2pix_decoder_block.2} parent=5 // pred_check_branch
      %182 = sbr.rel (%p179) target = $region12
    $region11: #{pix2pix_decoder_block.2} parent=5 // pred_region
      %s183 = ssub.s32 %s12, 1
      // Predicated region
      $region13: #{pix2pix_decoder_block.2} parent=11 // pred_check
        %p184 = pneg %p99
      $region14: #{pix2pix_decoder_block.2} parent=11 // pred_check_branch
        %186 = sbr.rel (%p184) target = $region16
      $region15: #{pix2pix_decoder_block.2} parent=11 // pred_region
        _
      $region16: #{pix2pix_decoder_block.2} parent=11 // pred_fallthru
        _
      // Predicated region
      $region17: #{pix2pix_decoder_block.2} parent=11 // pred_check
        %p187 = pneg %p120
      $region18: #{pix2pix_decoder_block.2} parent=11 // pred_check_branch
        %189 = sbr.rel (%p187) target = $region20
      $region19: #{pix2pix_decoder_block.2} parent=11 // pred_region
        _
      $region20: #{pix2pix_decoder_block.2} parent=11 // pred_fallthru
        _
    $region12: #{pix2pix_decoder_block.2} parent=5 // pred_fallthru
      _
    %p190 = scmp.lt.s32.totalorder %s12, 8
    // Predicated region
    $region21: #{pix2pix_decoder_block.2} parent=5 // pred_check
      %p191 = pneg %p190
    $region22: #{pix2pix_decoder_block.2} parent=5 // pred_check_branch
      %193 = sbr.rel (%p191) target = $region24
    $region23: #{pix2pix_decoder_block.2} parent=5 // pred_region
      // Predicated region
      $region25: #{pix2pix_decoder_block.2} parent=23 // pred_check
        %p194 = pneg %p46
      $region26: #{pix2pix_decoder_block.2} parent=23 // pred_check_branch
        %196 = sbr.rel (%p194) target = $region28
      $region27: #{pix2pix_decoder_block.2} parent=23 // pred_region
        %s197 = smul.u32 32, %s20
        %p198 = scmp.lt.s32.totalorder %s19, 3
        %s199 = scalar_select %p198, %s19, 3
        %p200 = scmp.lt.s32.totalorder %s197, 63
        %s201 = scalar_select %p200, %s197, 63
        %s202 = smul.addr %s199, 64
        %s203 = sadd.s32 %s201, %s202
        %s204 = smul.addr %s203, 4
        %s205 = scalar_lea.vmem %s0, %s204
        %s206 = smul.u32 32, %s20
      $region28: #{pix2pix_decoder_block.2} parent=23 // pred_fallthru
        _
      // Predicated region
      $region29: #{pix2pix_decoder_block.2} parent=23 // pred_check
        %p207 = pneg %p72
      $region30: #{pix2pix_decoder_block.2} parent=23 // pred_check_branch
        %209 = sbr.rel (%p207) target = $region32
      $region31: #{pix2pix_decoder_block.2} parent=23 // pred_region
        %p210 = scmp.lt.s32.totalorder %s19, 3
        %s211 = scalar_select %p210, %s19, 3
        %s212 = smul.addr %s211, 4
        %s213 = smul.addr %s212, 4
        %s214 = scalar_lea.vmem %s1, %s213
      $region32: #{pix2pix_decoder_block.2} parent=23 // pred_fallthru
        _
    $region24: #{pix2pix_decoder_block.2} parent=5 // pred_fallthru
      _
    %p215 = scmp.le.s32.totalorder 1, %s12
    %p216 = scmp.lt.s32.totalorder %s12, 9
    %p217 = pnand %p215, %p216
    %p218 = pneg %p217
    // Predicated region
    $region33: #{pix2pix_decoder_block.2} parent=5 // pred_check
      _
    $region34: #{pix2pix_decoder_block.2} parent=5 // pred_check_branch
      %220 = sbr.rel (%p217) target = $region36
    $region35: #{pix2pix_decoder_block.2} parent=5 // pred_region
      %s221 = ssub.s32 %s12, 1
      %s222 = smul.u32 32, %s22
      %p223 = scmp.lt.s32.totalorder %s21, 3
      %s224 = scalar_select %p223, %s21, 3
      %p225 = scmp.lt.s32.totalorder %s222, 63
      %s226 = scalar_select %p225, %s222, 63
      %s227 = smul.addr %s224, 64
      %s228 = sadd.s32 %s226, %s227
      %s229 = smul.addr %s228, 4
      %s230 = scalar_lea.vmem %s0, %s229
      %p231 = pneg %p52
      %p232 = pneg %p49
      %p233 = scmp.lt.s32.totalorder %s21, 3
      %s234 = scalar_select %p233, %s21, 3
      %s235 = smul.addr %s234, 4
      %s236 = smul.addr %s235, 4
      %s237 = scalar_lea.vmem %s1, %s236
      %p238 = pneg %p78
      %p239 = pneg %p75
      %p240 = pneg %p99
      %p241 = pneg %p96
      %p242 = pneg %p120
      %p243 = pneg %p117
      %p244 = pneg %p148
      %p245 = pneg %p145
      %s246 = smul.u32 32, %s22
      %p247 = scmp.lt.s32.totalorder %s21, 3
      %s248 = scalar_select %p247, %s21, 3
      %p249 = scmp.lt.s32.totalorder %s246, 63
      %s250 = scalar_select %p249, %s246, 63
      %s251 = smul.addr %s248, 64
      %s252 = sadd.s32 %s250, %s251
      %s253 = smul.addr %s252, 4
      %s254 = scalar_lea.vmem %s4, %s253
      %p255 = pneg %p169
      %p256 = pneg %p166
      %s257 = smul.u32 32, %s22
      %p258 = scmp.lt.s32.totalorder %s21, 3
      %s259 = scalar_select %p258, %s21, 3
      %p260 = scmp.lt.s32.totalorder %s257, 63
      %s261 = scalar_select %p260, %s257, 63
      %s262 = smul.addr %s259, 64
      %s263 = sadd.s32 %s261, %s262
      %s264 = smul.addr %s263, 4
      %s265 = scalar_lea.vmem %s0, %s264
      %s266 = smul.u32 32, %s22
      %p267 = scmp.lt.s32.totalorder %s21, 3
      %s268 = scalar_select %p267, %s21, 3
      %s269 = smul.addr %s268, 4
      %s270 = smul.addr %s269, 4
      %s271 = scalar_lea.vmem %s1, %s270
      %s272 = smul.u32 32, %s22
      %p273 = scmp.lt.s32.totalorder %s21, 3
      %s274 = scalar_select %p273, %s21, 3
      %p275 = scmp.lt.s32.totalorder %s272, 63
      %s276 = scalar_select %p275, %s272, 63
      %s277 = smul.addr %s274, 64
      %s278 = sadd.s32 %s276, %s277
      %s279 = smul.addr %s278, 4
      %s280 = scalar_lea.vmem %s4, %s279
      %s281 = smul.u32 32, %s22
      %p283 = scmp.eq.s32.totalorder %s21, 0
      %p284 = scmp.eq.s32.totalorder %s22, 0
      %p285 = pnand %p283, %p284
      %p286 = pneg %p285
      // Predicated region
      $region37: #{pix2pix_decoder_block.2} parent=35 // pred_check
        _
      $region38: #{pix2pix_decoder_block.2} parent=35 // pred_check_branch
        %288 = sbr.rel (%p285) target = $region40
      $region39: #{pix2pix_decoder_block.2} parent=35 // pred_region
        %289 = vst [vmem:[#allocation2] sm:$0x3] 0.0
      $region40: #{pix2pix_decoder_block.2} parent=35 // pred_fallthru
        _
      %v290 = vld [vmem:[%s265] sm:$0xf]
      %v291 = vld [vmem:[%s265 + $0x4] sm:$0xf]
      %v292 = vld [vmem:[%s265 + $0x8] sm:$0xf]
      %v293 = vld [vmem:[%s265 + $0xc] sm:$0xf]
      %v294 = vld [vmem:[%s265 + $0x10] sm:$0xf]
      %v295 = vld [vmem:[%s265 + $0x14] sm:$0xf]
      %v296 = vld [vmem:[%s265 + $0x18] sm:$0xf]
      %v297 = vld [vmem:[%s265 + $0x1c] sm:$0xf]
      %v298 = vld [vmem:[%s265 + $0x20] sm:$0xf]
      %v299 = vld [vmem:[%s265 + $0x24] sm:$0xf]
      %v300 = vld [vmem:[%s265 + $0x28] sm:$0xf]
      %v301 = vld [vmem:[%s265 + $0x2c] sm:$0xf]
      %v302 = vld [vmem:[%s265 + $0x30] sm:$0xf]
      %v303 = vld [vmem:[%s265 + $0x34] sm:$0xf]
      %v304 = vld [vmem:[%s265 + $0x38] sm:$0xf]
      %v305 = vld [vmem:[%s265 + $0x3c] sm:$0xf]
      %v306 = vld [vmem:[%s265 + $0x40] sm:$0xf]
      %v307 = vld [vmem:[%s265 + $0x44] sm:$0xf]
      %v308 = vld [vmem:[%s265 + $0x48] sm:$0xf]
      %v309 = vld [vmem:[%s265 + $0x4c] sm:$0xf]
      %v310 = vld [vmem:[%s265 + $0x50] sm:$0xf]
      %v311 = vld [vmem:[%s265 + $0x54] sm:$0xf]
      %v312 = vld [vmem:[%s265 + $0x58] sm:$0xf]
      %v313 = vld [vmem:[%s265 + $0x5c] sm:$0xf]
      %v314 = vld [vmem:[%s265 + $0x60] sm:$0xf]
      %v315 = vld [vmem:[%s265 + $0x64] sm:$0xf]
      %v316 = vld [vmem:[%s265 + $0x68] sm:$0xf]
      %v317 = vld [vmem:[%s265 + $0x6c] sm:$0xf]
      %v318 = vld [vmem:[%s265 + $0x70] sm:$0xf]
      %v319 = vld [vmem:[%s265 + $0x74] sm:$0xf]
      %v320 = vld [vmem:[%s265 + $0x78] sm:$0xf]
      %v321 = vld [vmem:[%s265 + $0x7c] sm:$0xf]
      %v322 = vld [vmem:[%s271] sm:$0xf]
      %v323 = vld [vmem:[%s271 + $0x4] sm:$0xf]
      %v324 = vld [vmem:[%s271 + $0x8] sm:$0xf]
      %v325 = vld [vmem:[%s271 + $0xc] sm:$0xf]
      %v358 = vunpack.c.l.b16 %v290
      %v359 = vunpack.c.l.b16 %v291
      %v360 = vunpack.c.l.b16 %v292
      %v361 = vunpack.c.l.b16 %v293
      %v362 = vunpack.c.l.b16 %v294
      %v363 = vunpack.c.l.b16 %v295
      %v364 = vunpack.c.l.b16 %v296
      %v365 = vunpack.c.l.b16 %v297
      %v366 = vunpack.c.l.b16 %v298
      %v367 = vunpack.c.l.b16 %v299
      %v368 = vunpack.c.l.b16 %v300
      %v369 = vunpack.c.l.b16 %v301
      %v370 = vunpack.c.l.b16 %v302
      %v371 = vunpack.c.l.b16 %v303
      %v372 = vunpack.c.l.b16 %v304
      %v373 = vunpack.c.l.b16 %v305
      %v374 = vunpack.c.l.b16 %v306
      %v375 = vunpack.c.l.b16 %v307
      %v376 = vunpack.c.l.b16 %v308
      %v377 = vunpack.c.l.b16 %v309
      %v378 = vunpack.c.l.b16 %v310
      %v379 = vunpack.c.l.b16 %v311
      %v380 = vunpack.c.l.b16 %v312
      %v381 = vunpack.c.l.b16 %v313
      %v382 = vunpack.c.l.b16 %v314
      %v383 = vunpack.c.l.b16 %v315
      %v384 = vunpack.c.l.b16 %v316
      %v385 = vunpack.c.l.b16 %v317
      %v386 = vunpack.c.l.b16 %v318
      %v387 = vunpack.c.l.b16 %v319
      %v388 = vunpack.c.l.b16 %v320
      %v389 = vunpack.c.l.b16 %v321
      %v390 = vpack.c.b16 %v359, %v358
      %v391 = vpack.c.b16 %v361, %v360
      %v392 = vpack.c.b16 %v363, %v362
      %v393 = vpack.c.b16 %v365, %v364
      %v394 = vpack.c.b16 %v367, %v366
      %v395 = vpack.c.b16 %v369, %v368
      %v396 = vpack.c.b16 %v371, %v370
      %v397 = vpack.c.b16 %v373, %v372
      %v398 = vpack.c.b16 %v375, %v374
      %v399 = vpack.c.b16 %v377, %v376
      %v400 = vpack.c.b16 %v379, %v378
      %v401 = vpack.c.b16 %v381, %v380
      %v402 = vpack.c.b16 %v383, %v382
      %v403 = vpack.c.b16 %v385, %v384
      %v404 = vpack.c.b16 %v387, %v386
      %v405 = vpack.c.b16 %v389, %v388
      %v410 = vunpack.c.l.b16 %v322
      %v411 = vunpack.c.l.b16 %v323
      %v412 = vunpack.c.l.b16 %v324
      %v413 = vunpack.c.l.b16 %v325
      %v414 = vpack.c.b16 %v411, %v410
      %v415 = vpack.c.b16 %v413, %v412
      %vm418 = vcmask 261120
      %v420 = vsel %vm418, %v390, 0
      %v423 = vsel %vm418, %v391, 0
      %v426 = vsel %vm418, %v392, 0
      %v429 = vsel %vm418, %v393, 0
      %v432 = vsel %vm418, %v394, 0
      %v435 = vsel %vm418, %v395, 0
      %v438 = vsel %vm418, %v396, 0
      %v441 = vsel %vm418, %v397, 0
      %v444 = vsel %vm418, %v398, 0
      %v447 = vsel %vm418, %v399, 0
      %v450 = vsel %vm418, %v400, 0
      %v453 = vsel %vm418, %v401, 0
      %v456 = vsel %vm418, %v402, 0
      %v459 = vsel %vm418, %v403, 0
      %v462 = vsel %vm418, %v404, 0
      %v465 = vsel %vm418, %v405, 0
      %467 = vmatprep.subr.bf16.mxu0 0
      %468 = vmatpush1.bf16.msra.mxu0 0
      %469 = vmatprep.subr.bf16.mxu0 0
      %470 = vmatpush1.bf16.msra.mxu0 0
      %471 = vmatprep.subr.bf16.mxu0 0
      %472 = vmatpush1.bf16.msra.mxu0 0
      %473 = vmatprep.subr.bf16.mxu0 0
      %474 = vmatpush1.bf16.msra.mxu0 0
      %475 = vmatprep.subr.bf16.mxu0 0
      %476 = vmatpush1.bf16.msra.mxu0 0
      %477 = vmatprep.subr.bf16.mxu0 0
      %478 = vmatpush1.bf16.msra.mxu0 0
      %479 = vmatprep.subr.bf16.mxu0 0
      %480 = vmatpush1.bf16.msra.mxu0 %v415
      %481 = vmatprep.subr.bf16.mxu0 0
      %482 = vmatpush1.bf16.msra.mxu0 %v414
      %483 = vmatprep.subr.bf16.mxu0 0
      %484 = vmatpush2.bf16.msra.mxu0 0
      %485 = vmatprep.subr.bf16.mxu0 0
      %486 = vmatpush2.bf16.msra.mxu0 0
      %487 = vmatprep.subr.bf16.mxu0 0
      %488 = vmatpush2.bf16.msra.mxu0 0
      %489 = vmatprep.subr.bf16.mxu0 0
      %490 = vmatpush2.bf16.msra.mxu0 0
      %491 = vmatprep.subr.bf16.mxu0 0
      %492 = vmatpush2.bf16.msra.mxu0 0
      %493 = vmatprep.subr.bf16.mxu0 0
      %494 = vmatpush2.bf16.msra.mxu0 0
      %495 = vmatprep.subr.bf16.mxu0 0
      %496 = vmatpush2.bf16.msra.mxu0 0
      %497 = vmatprep.subr.bf16.mxu0 0
      %498 = vmatpush2.bf16.msra.mxu0 0
      %499 = vmatprep.mubr.bf16.mxu0 0
      %500 = vmatmul.mubr.bf16.gmra.mxu0 %v420
      %v501 = vpop.f32.mrf.mxu0
      %v502 = vadd.f32 0.0, %v501
      %v503 = vpop.f32.mrf.mxu0
      %v504 = vpop.f32.mrf.mxu0
      %v505 = vadd.f32 0.0, %v504
      %v506 = vpop.f32.mrf.mxu0
      %507 = vmatprep.mubr.bf16.mxu0 0
      %508 = vmatmul.mubr.bf16.gmra.mxu0 %v423
      %v509 = vpop.f32.mrf.mxu0
      %v510 = vadd.f32 0.0, %v509
      %v511 = vpop.f32.mrf.mxu0
      %v512 = vpop.f32.mrf.mxu0
      %v513 = vadd.f32 0.0, %v512
      %v514 = vpop.f32.mrf.mxu0
      %515 = vmatprep.mubr.bf16.mxu0 0
      %516 = vmatmul.mubr.bf16.gmra.mxu0 %v426
      %v517 = vpop.f32.mrf.mxu0
      %v518 = vadd.f32 0.0, %v517
      %v519 = vpop.f32.mrf.mxu0
      %v520 = vpop.f32.mrf.mxu0
      %v521 = vadd.f32 0.0, %v520
      %v522 = vpop.f32.mrf.mxu0
      %523 = vmatprep.mubr.bf16.mxu0 0
      %524 = vmatmul.mubr.bf16.gmra.mxu0 %v429
      %v525 = vpop.f32.mrf.mxu0
      %v526 = vadd.f32 0.0, %v525
      %v527 = vpop.f32.mrf.mxu0
      %v528 = vpop.f32.mrf.mxu0
      %v529 = vadd.f32 0.0, %v528
      %v530 = vpop.f32.mrf.mxu0
      %531 = vmatprep.mubr.bf16.mxu0 0
      %532 = vmatmul.mubr.bf16.gmra.mxu0 %v432
      %v533 = vpop.f32.mrf.mxu0
      %v534 = vadd.f32 0.0, %v533
      %v535 = vpop.f32.mrf.mxu0
      %v536 = vpop.f32.mrf.mxu0
      %v537 = vadd.f32 0.0, %v536
      %v538 = vpop.f32.mrf.mxu0
      %539 = vmatprep.mubr.bf16.mxu0 0
      %540 = vmatmul.mubr.bf16.gmra.mxu0 %v435
      %v541 = vpop.f32.mrf.mxu0
      %v542 = vadd.f32 0.0, %v541
      %v543 = vpop.f32.mrf.mxu0
      %v544 = vpop.f32.mrf.mxu0
      %v545 = vadd.f32 0.0, %v544
      %v546 = vpop.f32.mrf.mxu0
      %547 = vmatprep.mubr.bf16.mxu0 0
      %548 = vmatmul.mubr.bf16.gmra.mxu0 %v438
      %v549 = vpop.f32.mrf.mxu0
      %v550 = vadd.f32 0.0, %v549
      %v551 = vpop.f32.mrf.mxu0
      %v552 = vpop.f32.mrf.mxu0
      %v553 = vadd.f32 0.0, %v552
      %v554 = vpop.f32.mrf.mxu0
      %555 = vmatprep.mubr.bf16.mxu0 0
      %556 = vmatmul.mubr.bf16.gmra.mxu0 %v441
      %v557 = vpop.f32.mrf.mxu0
      %v558 = vadd.f32 0.0, %v557
      %v559 = vpop.f32.mrf.mxu0
      %v560 = vpop.f32.mrf.mxu0
      %v561 = vadd.f32 0.0, %v560
      %v562 = vpop.f32.mrf.mxu0
      %563 = vmatprep.mubr.bf16.mxu0 0
      %564 = vmatmul.mubr.bf16.gmra.mxu0 %v444
      %v565 = vpop.f32.mrf.mxu0
      %v566 = vadd.f32 0.0, %v565
      %v567 = vpop.f32.mrf.mxu0
      %v568 = vpop.f32.mrf.mxu0
      %v569 = vadd.f32 0.0, %v568
      %v570 = vpop.f32.mrf.mxu0
      %571 = vmatprep.mubr.bf16.mxu0 0
      %572 = vmatmul.mubr.bf16.gmra.mxu0 %v447
      %v573 = vpop.f32.mrf.mxu0
      %v574 = vadd.f32 0.0, %v573
      %v575 = vpop.f32.mrf.mxu0
      %v576 = vpop.f32.mrf.mxu0
      %v577 = vadd.f32 0.0, %v576
      %v578 = vpop.f32.mrf.mxu0
      %579 = vmatprep.mubr.bf16.mxu0 0
      %580 = vmatmul.mubr.bf16.gmra.mxu0 %v450
      %v581 = vpop.f32.mrf.mxu0
      %v582 = vadd.f32 0.0, %v581
      %v583 = vpop.f32.mrf.mxu0
      %v584 = vpop.f32.mrf.mxu0
      %v585 = vadd.f32 0.0, %v584
      %v586 = vpop.f32.mrf.mxu0
      %587 = vmatprep.mubr.bf16.mxu0 0
      %588 = vmatmul.mubr.bf16.gmra.mxu0 %v453
      %v589 = vpop.f32.mrf.mxu0
      %v590 = vadd.f32 0.0, %v589
      %v591 = vpop.f32.mrf.mxu0
      %v592 = vpop.f32.mrf.mxu0
      %v593 = vadd.f32 0.0, %v592
      %v594 = vpop.f32.mrf.mxu0
      %595 = vmatprep.mubr.bf16.mxu0 0
      %596 = vmatmul.mubr.bf16.gmra.mxu0 %v456
      %v597 = vpop.f32.mrf.mxu0
      %v598 = vadd.f32 0.0, %v597
      %v599 = vpop.f32.mrf.mxu0
      %v600 = vpop.f32.mrf.mxu0
      %v601 = vadd.f32 0.0, %v600
      %v602 = vpop.f32.mrf.mxu0
      %603 = vmatprep.mubr.bf16.mxu0 0
      %604 = vmatmul.mubr.bf16.gmra.mxu0 %v459
      %v605 = vpop.f32.mrf.mxu0
      %v606 = vadd.f32 0.0, %v605
      %v607 = vpop.f32.mrf.mxu0
      %v608 = vpop.f32.mrf.mxu0
      %v609 = vadd.f32 0.0, %v608
      %v610 = vpop.f32.mrf.mxu0
      %611 = vmatprep.mubr.bf16.mxu0 0
      %612 = vmatmul.mubr.bf16.gmra.mxu0 %v462
      %v613 = vpop.f32.mrf.mxu0
      %v614 = vadd.f32 0.0, %v613
      %v615 = vpop.f32.mrf.mxu0
      %v616 = vpop.f32.mrf.mxu0
      %v617 = vadd.f32 0.0, %v616
      %v618 = vpop.f32.mrf.mxu0
      %619 = vmatprep.mubr.bf16.mxu0 0
      %620 = vmatmul.mubr.bf16.gmra.mxu0 %v465
      %v621 = vpop.f32.mrf.mxu0
      %v622 = vadd.f32 0.0, %v621
      %v623 = vpop.f32.mrf.mxu0
      %v624 = vpop.f32.mrf.mxu0
      %v625 = vadd.f32 0.0, %v624
      %v626 = vpop.f32.mrf.mxu0
      %627 = vdwg.mxu0
      %v628 = vpack.c.bf16 %v505, %v502
      %v629 = vpack.c.bf16 %v513, %v510
      %v630 = vpack.c.bf16 %v521, %v518
      %v631 = vpack.c.bf16 %v529, %v526
      %v632 = vpack.c.bf16 %v537, %v534
      %v633 = vpack.c.bf16 %v545, %v542
      %v634 = vpack.c.bf16 %v553, %v550
      %v635 = vpack.c.bf16 %v561, %v558
      %v636 = vpack.c.bf16 %v569, %v566
      %v637 = vpack.c.bf16 %v577, %v574
      %v638 = vpack.c.bf16 %v585, %v582
      %v639 = vpack.c.bf16 %v593, %v590
      %v640 = vpack.c.bf16 %v601, %v598
      %v641 = vpack.c.bf16 %v609, %v606
      %v642 = vpack.c.bf16 %v617, %v614
      %v643 = vpack.c.bf16 %v625, %v622
      %v660 = vunpack.c.l.b16 %v628
      %v661 = vunpack.c.h.b16 %v628
      %v662 = vunpack.c.l.b16 %v629
      %v663 = vunpack.c.h.b16 %v629
      %v664 = vunpack.c.l.b16 %v630
      %v665 = vunpack.c.h.b16 %v630
      %v666 = vunpack.c.l.b16 %v631
      %v667 = vunpack.c.h.b16 %v631
      %v668 = vunpack.c.l.b16 %v632
      %v669 = vunpack.c.h.b16 %v632
      %v670 = vunpack.c.l.b16 %v633
      %v671 = vunpack.c.h.b16 %v633
      %v672 = vunpack.c.l.b16 %v634
      %v673 = vunpack.c.h.b16 %v634
      %v674 = vunpack.c.l.b16 %v635
      %v675 = vunpack.c.h.b16 %v635
      %v676 = vunpack.c.l.b16 %v636
      %v677 = vunpack.c.h.b16 %v636
      %v678 = vunpack.c.l.b16 %v637
      %v679 = vunpack.c.h.b16 %v637
      %v680 = vunpack.c.l.b16 %v638
      %v681 = vunpack.c.h.b16 %v638
      %v682 = vunpack.c.l.b16 %v639
      %v683 = vunpack.c.h.b16 %v639
      %v684 = vunpack.c.l.b16 %v640
      %v685 = vunpack.c.h.b16 %v640
      %v686 = vunpack.c.l.b16 %v641
      %v687 = vunpack.c.h.b16 %v641
      %v688 = vunpack.c.l.b16 %v642
      %v689 = vunpack.c.h.b16 %v642
      %v690 = vunpack.c.l.b16 %v643
      %v691 = vunpack.c.h.b16 %v643
      %v692 = vpack.c.b16 %v660, %v660
      %v693 = vpack.c.b16 %v661, %v661
      %v694 = vpack.c.b16 %v662, %v662
      %v695 = vpack.c.b16 %v663, %v663
      %v696 = vpack.c.b16 %v664, %v664
      %v697 = vpack.c.b16 %v665, %v665
      %v698 = vpack.c.b16 %v666, %v666
      %v699 = vpack.c.b16 %v667, %v667
      %v700 = vpack.c.b16 %v668, %v668
      %v701 = vpack.c.b16 %v669, %v669
      %v702 = vpack.c.b16 %v670, %v670
      %v703 = vpack.c.b16 %v671, %v671
      %v704 = vpack.c.b16 %v672, %v672
      %v705 = vpack.c.b16 %v673, %v673
      %v706 = vpack.c.b16 %v674, %v674
      %v707 = vpack.c.b16 %v675, %v675
      %v708 = vpack.c.b16 %v676, %v676
      %v709 = vpack.c.b16 %v677, %v677
      %v710 = vpack.c.b16 %v678, %v678
      %v711 = vpack.c.b16 %v679, %v679
      %v712 = vpack.c.b16 %v680, %v680
      %v713 = vpack.c.b16 %v681, %v681
      %v714 = vpack.c.b16 %v682, %v682
      %v715 = vpack.c.b16 %v683, %v683
      %v716 = vpack.c.b16 %v684, %v684
      %v717 = vpack.c.b16 %v685, %v685
      %v718 = vpack.c.b16 %v686, %v686
      %v719 = vpack.c.b16 %v687, %v687
      %v720 = vpack.c.b16 %v688, %v688
      %v721 = vpack.c.b16 %v689, %v689
      %v722 = vpack.c.b16 %v690, %v690
      %v723 = vpack.c.b16 %v691, %v691
      %756 = vst [vmem:[%s280] sm:$0xf] %v692
      %757 = vst [vmem:[%s280 + $0x4] sm:$0xf] %v693
      %758 = vst [vmem:[%s280 + $0x8] sm:$0xf] %v694
      %759 = vst [vmem:[%s280 + $0xc] sm:$0xf] %v695
      %760 = vst [vmem:[%s280 + $0x10] sm:$0xf] %v696
      %761 = vst [vmem:[%s280 + $0x14] sm:$0xf] %v697
      %762 = vst [vmem:[%s280 + $0x18] sm:$0xf] %v698
      %763 = vst [vmem:[%s280 + $0x1c] sm:$0xf] %v699
      %764 = vst [vmem:[%s280 + $0x20] sm:$0xf] %v700
      %765 = vst [vmem:[%s280 + $0x24] sm:$0xf] %v701
      %766 = vst [vmem:[%s280 + $0x28] sm:$0xf] %v702
      %767 = vst [vmem:[%s280 + $0x2c] sm:$0xf] %v703
      %768 = vst [vmem:[%s280 + $0x30] sm:$0xf] %v704
      %769 = vst [vmem:[%s280 + $0x34] sm:$0xf] %v705
      %770 = vst [vmem:[%s280 + $0x38] sm:$0xf] %v706
      %771 = vst [vmem:[%s280 + $0x3c] sm:$0xf] %v707
      %772 = vst [vmem:[%s280 + $0x40] sm:$0xf] %v708
      %773 = vst [vmem:[%s280 + $0x44] sm:$0xf] %v709
      %774 = vst [vmem:[%s280 + $0x48] sm:$0xf] %v710
      %775 = vst [vmem:[%s280 + $0x4c] sm:$0xf] %v711
      %776 = vst [vmem:[%s280 + $0x50] sm:$0xf] %v712
      %777 = vst [vmem:[%s280 + $0x54] sm:$0xf] %v713
      %778 = vst [vmem:[%s280 + $0x58] sm:$0xf] %v714
      %779 = vst [vmem:[%s280 + $0x5c] sm:$0xf] %v715
      %780 = vst [vmem:[%s280 + $0x60] sm:$0xf] %v716
      %781 = vst [vmem:[%s280 + $0x64] sm:$0xf] %v717
      %782 = vst [vmem:[%s280 + $0x68] sm:$0xf] %v718
      %783 = vst [vmem:[%s280 + $0x6c] sm:$0xf] %v719
      %784 = vst [vmem:[%s280 + $0x70] sm:$0xf] %v720
      %785 = vst [vmem:[%s280 + $0x74] sm:$0xf] %v721
      %786 = vst [vmem:[%s280 + $0x78] sm:$0xf] %v722
      %787 = vst [vmem:[%s280 + $0x7c] sm:$0xf] %v723
      %v788 = vld [vmem:[#allocation2] sm:$0x1]
      %v789 = vadd.f32 %v502, %v505
      %v790 = vadd.f32 %v789, %v510
      %v791 = vadd.f32 %v790, %v513
      %v792 = vadd.f32 %v791, %v518
      %v793 = vadd.f32 %v792, %v521
      %v794 = vadd.f32 %v793, %v526
      %v795 = vadd.f32 %v794, %v529
      %v796 = vadd.f32 %v795, %v534
      %v797 = vadd.f32 %v796, %v537
      %v798 = vadd.f32 %v797, %v542
      %v799 = vadd.f32 %v798, %v545
      %v800 = vadd.f32 %v799, %v550
      %v801 = vadd.f32 %v800, %v553
      %v802 = vadd.f32 %v801, %v558
      %v803 = vadd.f32 %v802, %v561
      %v804 = vadd.f32 %v803, %v566
      %v805 = vadd.f32 %v804, %v569
      %v806 = vadd.f32 %v805, %v574
      %v807 = vadd.f32 %v806, %v577
      %v808 = vadd.f32 %v807, %v582
      %v809 = vadd.f32 %v808, %v585
      %v810 = vadd.f32 %v809, %v590
      %v811 = vadd.f32 %v810, %v593
      %v812 = vadd.f32 %v811, %v598
      %v813 = vadd.f32 %v812, %v601
      %v814 = vadd.f32 %v813, %v606
      %v815 = vadd.f32 %v814, %v609
      %v816 = vadd.f32 %v815, %v614
      %v817 = vadd.f32 %v816, %v617
      %v818 = vadd.f32 %v817, %v622
      %v819 = vadd.f32 %v818, %v625
      %v820 = vrot.slane %v819, 4
      %v821 = vadd.f32 %v819, %v820
      %v822 = vrot.slane %v821, 2
      %v823 = vadd.f32 %v821, %v822
      %v824 = vrot.slane %v823, 1
      %v825 = vadd.f32 %v823, %v824
      %v826 = vadd.f32 %v788, %v825
      %827 = vst [vmem:[#allocation2] sm:$0x1] %v826
      %v828 = vld [vmem:[#allocation2 + $0x1] sm:$0x1]
      %v829 = vmul.f32 %v502, %v502
      %v830 = vmul.f32 %v505, %v505
      %v831 = vmul.f32 %v510, %v510
      %v832 = vmul.f32 %v513, %v513
      %v833 = vmul.f32 %v518, %v518
      %v834 = vmul.f32 %v521, %v521
      %v835 = vmul.f32 %v526, %v526
      %v836 = vmul.f32 %v529, %v529
      %v837 = vmul.f32 %v534, %v534
      %v838 = vmul.f32 %v537, %v537
      %v839 = vmul.f32 %v542, %v542
      %v840 = vmul.f32 %v545, %v545
      %v841 = vmul.f32 %v550, %v550
      %v842 = vmul.f32 %v553, %v553
      %v843 = vmul.f32 %v558, %v558
      %v844 = vmul.f32 %v561, %v561
      %v845 = vmul.f32 %v566, %v566
      %v846 = vmul.f32 %v569, %v569
      %v847 = vmul.f32 %v574, %v574
      %v848 = vmul.f32 %v577, %v577
      %v849 = vmul.f32 %v582, %v582
      %v850 = vmul.f32 %v585, %v585
      %v851 = vmul.f32 %v590, %v590
      %v852 = vmul.f32 %v593, %v593
      %v853 = vmul.f32 %v598, %v598
      %v854 = vmul.f32 %v601, %v601
      %v855 = vmul.f32 %v606, %v606
      %v856 = vmul.f32 %v609, %v609
      %v857 = vmul.f32 %v614, %v614
      %v858 = vmul.f32 %v617, %v617
      %v859 = vmul.f32 %v622, %v622
      %v860 = vmul.f32 %v625, %v625
      %v861 = vadd.f32 %v829, %v830
      %v862 = vadd.f32 %v861, %v831
      %v863 = vadd.f32 %v862, %v832
      %v864 = vadd.f32 %v863, %v833
      %v865 = vadd.f32 %v864, %v834
      %v866 = vadd.f32 %v865, %v835
      %v867 = vadd.f32 %v866, %v836
      %v868 = vadd.f32 %v867, %v837
      %v869 = vadd.f32 %v868, %v838
      %v870 = vadd.f32 %v869, %v839
      %v871 = vadd.f32 %v870, %v840
      %v872 = vadd.f32 %v871, %v841
      %v873 = vadd.f32 %v872, %v842
      %v874 = vadd.f32 %v873, %v843
      %v875 = vadd.f32 %v874, %v844
      %v876 = vadd.f32 %v875, %v845
      %v877 = vadd.f32 %v876, %v846
      %v878 = vadd.f32 %v877, %v847
      %v879 = vadd.f32 %v878, %v848
      %v880 = vadd.f32 %v879, %v849
      %v881 = vadd.f32 %v880, %v850
      %v882 = vadd.f32 %v881, %v851
      %v883 = vadd.f32 %v882, %v852
      %v884 = vadd.f32 %v883, %v853
      %v885 = vadd.f32 %v884, %v854
      %v886 = vadd.f32 %v885, %v855
      %v887 = vadd.f32 %v886, %v856
      %v888 = vadd.f32 %v887, %v857
      %v889 = vadd.f32 %v888, %v858
      %v890 = vadd.f32 %v889, %v859
      %v891 = vadd.f32 %v890, %v860
      %v892 = vrot.slane %v891, 4
      %v893 = vadd.f32 %v891, %v892
      %v894 = vrot.slane %v893, 2
      %v895 = vadd.f32 %v893, %v894
      %v896 = vrot.slane %v895, 1
      %v897 = vadd.f32 %v895, %v896
      %v898 = vadd.f32 %v828, %v897
      %899 = vst [vmem:[#allocation2 + $0x1] sm:$0x1] %v898
      %p900 = scmp.eq.s32.totalorder %s21, 3
      %p901 = scmp.eq.s32.totalorder %s22, 1
      %p902 = pnand %p900, %p901
      %p903 = pneg %p902
      // Predicated region
      $region41: #{pix2pix_decoder_block.2} parent=35 // pred_check
        _
      $region42: #{pix2pix_decoder_block.2} parent=35 // pred_check_branch
        %905 = sbr.rel (%p902) target = $region44
      $region43: #{pix2pix_decoder_block.2} parent=35 // pred_region
        %v906 = vld [vmem:[#allocation2] sm:$0x1]
        %v907 = vmul.f32 %v906, 0.00048828125
        %v908 = vld [vmem:[#allocation2 + $0x1] sm:$0x1]
        %v909 = vmul.f32 %v908, 0.00048828125
        %v910 = vmul.f32 %v907, %v907
        %v911 = vsub.f32 %v909, %v910
        %v912 = vmax.f32 %v911, 0.0
        %v913 = vld [vmem:[%s2] sm:$0x1]
        %v914 = vadd.f32 %v912, 1e-05
        %v915 = vrsqrt.pop %v914
        %v916 = vmul.f32 %v913, %v915
        %v917 = vmul.f32 %v916, 2.0
        %918 = vst [vmem:[%s5] sm:$0x1] %v917
        %v919 = vld [vmem:[%s3] sm:$0x1]
        %v920 = vmul.f32 %v907, %v916
        %v921 = vsub.f32 %v919, %v920
        %v922 = vmul.f32 %v921, 2.0
        %923 = vst [vmem:[%s5 + $0x1] sm:$0x1] %v922
      $region44: #{pix2pix_decoder_block.2} parent=35 // pred_fallthru
        _
      %s924 = smul.u32 32, %s22
      %p925 = scmp.lt.s32.totalorder %s21, 3
      %s926 = scalar_select %p925, %s21, 3
      %p927 = scmp.lt.s32.totalorder %s924, 63
      %s928 = scalar_select %p927, %s924, 63
      %s929 = smul.addr %s926, 64
      %s930 = sadd.s32 %s928, %s929
      %s931 = smul.addr %s930, 4
      %s932 = scalar_lea.vmem %s4, %s931
      // Predicated region
      $region45: #{pix2pix_decoder_block.2} parent=35 // pred_check
        %p933 = pneg %p145
      $region46: #{pix2pix_decoder_block.2} parent=35 // pred_check_branch
        %935 = sbr.rel (%p933) target = $region48
      $region47: #{pix2pix_decoder_block.2} parent=35 // pred_region
        %s936 = smul.u32 32, %s22
      $region48: #{pix2pix_decoder_block.2} parent=35 // pred_fallthru
        _
      // Predicated region
      $region49: #{pix2pix_decoder_block.2} parent=35 // pred_check
        %p937 = pneg %p166
      $region50: #{pix2pix_decoder_block.2} parent=35 // pred_check_branch
        %939 = sbr.rel (%p937) target = $region52
      $region51: #{pix2pix_decoder_block.2} parent=35 // pred_region
        _
      $region52: #{pix2pix_decoder_block.2} parent=35 // pred_fallthru
        _
      // Predicated region
      $region53: #{pix2pix_decoder_block.2} parent=35 // pred_check
        %p940 = pneg %p166
      $region54: #{pix2pix_decoder_block.2} parent=35 // pred_check_branch
        %942 = sbr.rel (%p940) target = $region56
      $region55: #{pix2pix_decoder_block.2} parent=35 // pred_region
        _
      $region56: #{pix2pix_decoder_block.2} parent=35 // pred_fallthru
        _
    $region36: #{pix2pix_decoder_block.2} parent=5 // pred_fallthru
      _
    %p943 = scmp.le.s32.totalorder 2, %s12
    // Predicated region
    $region57: #{pix2pix_decoder_block.2} parent=5 // pred_check
      %p944 = pneg %p943
    $region58: #{pix2pix_decoder_block.2} parent=5 // pred_check_branch
      %946 = sbr.rel (%p944) target = $region60
    $region59: #{pix2pix_decoder_block.2} parent=5 // pred_region
      %s947 = ssub.s32 %s12, 2
      // Predicated region
      $region61: #{pix2pix_decoder_block.2} parent=59 // pred_check
        %p948 = pneg %p151
      $region62: #{pix2pix_decoder_block.2} parent=59 // pred_check_branch
        %950 = sbr.rel (%p948) target = $region64
      $region63: #{pix2pix_decoder_block.2} parent=59 // pred_region
        %s951 = smul.u32 32, %s24
        %p952 = scmp.lt.s32.totalorder %s23, 3
        %s953 = scalar_select %p952, %s23, 3
        %p954 = scmp.lt.s32.totalorder %s951, 63
        %s955 = scalar_select %p954, %s951, 63
        %s956 = smul.addr %s953, 64
        %s957 = sadd.s32 %s955, %s956
        %s958 = smul.addr %s957, 4
        %s959 = scalar_lea.vmem %s4, %s958
      $region64: #{pix2pix_decoder_block.2} parent=59 // pred_fallthru
        _
    $region60: #{pix2pix_decoder_block.2} parent=5 // pred_fallthru
      _
  $region6: #{pix2pix_decoder_block.2} parent=0 // loop_footer
    %s16 = sadd.s32 1, %s12
  $region7: #{pix2pix_decoder_block.2} parent=0 // loop_footer_branch
    %11 = sbr.rel target = $region3
  $region8: #{pix2pix_decoder_block.2} parent=0 // loop_exit
    _

// kernel: pix2pix_decoder_block.3
$region0: #{pix2pix_decoder_block.3}
  #allocation0 [shape = 'u32[]', space=smem, size = 0x4, offset = 0x4, fixed_abs, tag = 'smem constant byte address 0x4 - core index']
  #allocation1 [shape = 'u32[144,128]{1,0:T(1,128)}', space=vmem, size = 0x12000, scoped, tag = 'internal scratch']
  %s0 = inlined_call_operand.vmem [shape: bf16[2048,128], index: 0, kind: input, shape index: {}]
  %s1 = inlined_call_operand.vmem [shape: f32[2,128], index: 1, kind: input, shape index: {}]
  %s2 = inlined_call_operand.vmem [shape: bf16[2048,128], index: 2, kind: input, shape index: {}]
  %s3 = inlined_call_operand.vmem [shape: f32[2048,128], index: 3, kind: output, shape index: {}]
  %s4 = sld [smem:[#allocation0]]
  $region45: #{pix2pix_decoder_block.3} parent=0
    _
  %s6 = ssub.s32 1, %s4
  %s7 = scalar_select 0, %s6, %s4
  loop: start=0, step=1, limit=4
  $region2: #{pix2pix_decoder_block.3} parent=0 // loop_pre_header
    _
  $region3: #{pix2pix_decoder_block.3} parent=0 // loop_header
    %s9 = sphi 0, %s13
    %p10 = scmp.ge.s32.totalorder %s9, 4
    %s19 = sphi 0, %s21
    %s22 = sphi 0, %s19
    %s23 = sphi 0, %s22
    %s39 = sphi 0, %s23
    %s43 = sphi 0, %s43
    %s45 = sphi 0, %s43
    %s46 = sphi 0, %s45
    %s60 = sphi 0, %s46
    %s66 = sphi 0, %s68
    %s69 = sphi 0, %s66
    %s70 = sphi 0, %s69
    %s86 = sphi 0, %s70
    %s92 = sphi 0, %s94
    %s95 = sphi 0, %s92
    %s96 = sphi 0, %s95
    %s112 = sphi 0, %s96
  $region4: #{pix2pix_decoder_block.3} parent=0 // loop_header_branch
    %12 = sbr.rel (%p10) target = $region8
  $region5: #{pix2pix_decoder_block.3} parent=0 // loop_body
    %s14 = ssub.s32 %s9, 1
    %s15 = ssub.s32 %s9, 2
    %s16 = sadd.s32 %s9, 1
    %s17 = ssub.s32 %s9, %s16
    %p18 = scmp.eq.s32.totalorder %s17, 0
    %s20 = sadd.s32 %s19, 1
    %s21 = scalar_select %p18, %s19, %s20
    %p24 = pneg %p18
    %p25 = scmp.eq.s32.totalorder %s9, 1
    %p26 = por %p24, %p25
    %p27 = scmp.ne.s32.totalorder %s19, %s22
    %p28 = scmp.eq.s32.totalorder %s9, 0
    %p29 = por %p27, %p28
    %p30 = scmp.ne.s32.totalorder %s19, %s22
    %p31 = scmp.eq.s32.totalorder %s14, 1
    %p32 = por %p30, %p31
    %p33 = scmp.ne.s32.totalorder %s22, %s23
    %p34 = scmp.eq.s32.totalorder %s14, 0
    %p35 = por %p33, %p34
    %p36 = scmp.ne.s32.totalorder %s22, %s23
    %p37 = scmp.eq.s32.totalorder %s15, 1
    %p38 = por %p36, %p37
    %p40 = scmp.ne.s32.totalorder %s23, %s39
    %p41 = scmp.eq.s32.totalorder %s15, 0
    %p42 = por %p40, %p41
    %s44 = sadd.s32 %s43, 1
    %p47 = scmp.eq.s32.totalorder %s9, 1
    %p48 = scmp.ne.s32.totalorder %s43, %s45
    %p49 = scmp.eq.s32.totalorder %s9, 0
    %p50 = por %p48, %p49
    %p51 = scmp.ne.s32.totalorder %s43, %s45
    %p52 = scmp.eq.s32.totalorder %s14, 1
    %p53 = por %p51, %p52
    %p54 = scmp.ne.s32.totalorder %s45, %s46
    %p55 = scmp.eq.s32.totalorder %s14, 0
    %p56 = por %p54, %p55
    %p57 = scmp.ne.s32.totalorder %s45, %s46
    %p58 = scmp.eq.s32.totalorder %s15, 1
    %p59 = por %p57, %p58
    %p61 = scmp.ne.s32.totalorder %s46, %s60
    %p62 = scmp.eq.s32.totalorder %s15, 0
    %p63 = por %p61, %p62
    %s64 = ssub.s32 %s9, %s16
    %p65 = scmp.eq.s32.totalorder %s64, 0
    %s67 = sadd.s32 %s66, 1
    %s68 = scalar_select %p65, %s66, %s67
    %p71 = pneg %p65
    %p72 = scmp.eq.s32.totalorder %s9, 1
    %p73 = por %p71, %p72
    %p74 = scmp.ne.s32.totalorder %s66, %s69
    %p75 = scmp.eq.s32.totalorder %s9, 0
    %p76 = por %p74, %p75
    %p77 = scmp.ne.s32.totalorder %s66, %s69
    %p78 = scmp.eq.s32.totalorder %s14, 1
    %p79 = por %p77, %p78
    %p80 = scmp.ne.s32.totalorder %s69, %s70
    %p81 = scmp.eq.s32.totalorder %s14, 0
    %p82 = por %p80, %p81
    %p83 = scmp.ne.s32.totalorder %s69, %s70
    %p84 = scmp.eq.s32.totalorder %s15, 1
    %p85 = por %p83, %p84
    %p87 = scmp.ne.s32.totalorder %s70, %s86
    %p88 = scmp.eq.s32.totalorder %s15, 0
    %p89 = por %p87, %p88
    %s90 = ssub.s32 %s9, %s16
    %p91 = scmp.eq.s32.totalorder %s90, 0
    %s93 = sadd.s32 %s92, 1
    %s94 = scalar_select %p91, %s92, %s93
    %p97 = pneg %p91
    %p98 = scmp.eq.s32.totalorder %s9, 1
    %p99 = por %p97, %p98
    %p100 = scmp.ne.s32.totalorder %s92, %s95
    %p101 = scmp.eq.s32.totalorder %s9, 0
    %p102 = por %p100, %p101
    %p103 = scmp.ne.s32.totalorder %s92, %s95
    %p104 = scmp.eq.s32.totalorder %s14, 1
    %p105 = por %p103, %p104
    %p106 = scmp.ne.s32.totalorder %s95, %s96
    %p107 = scmp.eq.s32.totalorder %s14, 0
    %p108 = por %p106, %p107
    %p109 = scmp.ne.s32.totalorder %s95, %s96
    %p110 = scmp.eq.s32.totalorder %s15, 1
    %p111 = por %p109, %p110
    %p113 = scmp.ne.s32.totalorder %s96, %s112
    %p114 = scmp.eq.s32.totalorder %s15, 0
    %p115 = por %p113, %p114
    %p116 = scmp.le.s32.totalorder 1, %s9
    %p117 = scmp.lt.s32.totalorder %s9, 3
    %p118 = pnand %p116, %p117
    %p119 = pneg %p118
    // Predicated region
    $region9: #{pix2pix_decoder_block.3} parent=5 // pred_check
      _
    $region10: #{pix2pix_decoder_block.3} parent=5 // pred_check_branch
      %121 = sbr.rel (%p118) target = $region12
    $region11: #{pix2pix_decoder_block.3} parent=5 // pred_region
      %s122 = ssub.s32 %s9, 1
      // Predicated region
      $region13: #{pix2pix_decoder_block.3} parent=11 // pred_check
        %p123 = pneg %p56
      $region14: #{pix2pix_decoder_block.3} parent=11 // pred_check_branch
        %125 = sbr.rel (%p123) target = $region16
      $region15: #{pix2pix_decoder_block.3} parent=11 // pred_region
        _
      $region16: #{pix2pix_decoder_block.3} parent=11 // pred_fallthru
        _
    $region12: #{pix2pix_decoder_block.3} parent=5 // pred_fallthru
      _
    %p126 = scmp.lt.s32.totalorder %s9, 2
    // Predicated region
    $region17: #{pix2pix_decoder_block.3} parent=5 // pred_check
      %p127 = pneg %p126
    $region18: #{pix2pix_decoder_block.3} parent=5 // pred_check_branch
      %129 = sbr.rel (%p127) target = $region20
    $region19: #{pix2pix_decoder_block.3} parent=5 // pred_region
      // Predicated region
      $region21: #{pix2pix_decoder_block.3} parent=19 // pred_check
        %p130 = pneg %p29
      $region22: #{pix2pix_decoder_block.3} parent=19 // pred_check_branch
        %132 = sbr.rel (%p130) target = $region24
      $region23: #{pix2pix_decoder_block.3} parent=19 // pred_region
        %s133 = smul.u32 128, %s9
        %p134 = scmp.lt.s32.totalorder %s133, 255
        %s135 = scalar_select %p134, %s133, 255
        %s136 = smul.addr %s135, 4
        %s137 = scalar_lea.vmem %s0, %s136
        %s138 = smul.u32 128, %s9
      $region24: #{pix2pix_decoder_block.3} parent=19 // pred_fallthru
        _
      // Predicated region
      $region25: #{pix2pix_decoder_block.3} parent=19 // pred_check
        %p139 = pneg %p76
      $region26: #{pix2pix_decoder_block.3} parent=19 // pred_check_branch
        %141 = sbr.rel (%p139) target = $region28
      $region27: #{pix2pix_decoder_block.3} parent=19 // pred_region
        %s142 = smul.u32 128, %s9
        %p143 = scmp.lt.s32.totalorder %s142, 255
        %s144 = scalar_select %p143, %s142, 255
        %s145 = smul.addr %s144, 4
        %s146 = scalar_lea.vmem %s2, %s145
        %s147 = smul.u32 128, %s9
      $region28: #{pix2pix_decoder_block.3} parent=19 // pred_fallthru
        _
    $region20: #{pix2pix_decoder_block.3} parent=5 // pred_fallthru
      _
    %p148 = scmp.le.s32.totalorder 1, %s9
    %p149 = scmp.lt.s32.totalorder %s9, 3
    %p150 = pnand %p148, %p149
    %p151 = pneg %p150
    // Predicated region
    $region29: #{pix2pix_decoder_block.3} parent=5 // pred_check
      _
    $region30: #{pix2pix_decoder_block.3} parent=5 // pred_check_branch
      %153 = sbr.rel (%p150) target = $region32
    $region31: #{pix2pix_decoder_block.3} parent=5 // pred_region
      %s154 = ssub.s32 %s9, 1
      %s155 = smul.u32 128, %s14
      %p156 = scmp.lt.s32.totalorder %s155, 255
      %s157 = scalar_select %p156, %s155, 255
      %s158 = smul.addr %s157, 4
      %s159 = scalar_lea.vmem %s0, %s158
      %p160 = pneg %p35
      %p161 = pneg %p32
      %p162 = pneg %p56
      %p163 = pneg %p53
      %s164 = smul.u32 128, %s14
      %p165 = scmp.lt.s32.totalorder %s164, 255
      %s166 = scalar_select %p165, %s164, 255
      %s167 = smul.addr %s166, 4
      %s168 = scalar_lea.vmem %s2, %s167
      %p169 = pneg %p82
      %p170 = pneg %p79
      %p171 = pneg %p108
      %p172 = pneg %p105
      %s173 = smul.u32 128, %s14
      %p174 = scmp.lt.s32.totalorder %s173, 255
      %s175 = scalar_select %p174, %s173, 255
      %s176 = smul.addr %s175, 8
      %s177 = scalar_lea.vmem %s3, %s176
      %s178 = smul.u32 128, %s14
      %p179 = scmp.lt.s32.totalorder %s178, 255
      %s180 = scalar_select %p179, %s178, 255
      %s181 = smul.addr %s180, 4
      %s182 = scalar_lea.vmem %s0, %s181
      %s183 = smul.u32 128, %s14
      %s184 = smul.u32 128, %s14
      %p185 = scmp.lt.s32.totalorder %s184, 255
      %s186 = scalar_select %p185, %s184, 255
      %s187 = smul.addr %s186, 4
      %s188 = scalar_lea.vmem %s2, %s187
      %s189 = smul.u32 128, %s14
      %s190 = smul.u32 128, %s14
      %p191 = scmp.lt.s32.totalorder %s190, 255
      %s192 = scalar_select %p191, %s190, 255
      %s193 = smul.addr %s192, 8
      %s194 = scalar_lea.vmem %s3, %s193
      %s195 = smul.u32 128, %s14
      %v196 = vld [vmem:[%s1] sm:$0x1]
      %v197 = vld [vmem:[%s1 + $0x1] sm:$0x1]
      %v198 = vld [vmem:[%s182] sm:$0xf]
      %v199 = vld [vmem:[%s182 + $0x4] sm:$0xf]
      %v200 = vld [vmem:[%s182 + $0x8] sm:$0xf]
      %v201 = vld [vmem:[%s182 + $0xc] sm:$0xf]
      %v202 = vld [vmem:[%s182 + $0x10] sm:$0xf]
      %v203 = vld [vmem:[%s182 + $0x14] sm:$0xf]
      %v204 = vld [vmem:[%s182 + $0x18] sm:$0xf]
      %v205 = vld [vmem:[%s182 + $0x1c] sm:$0xf]
      %v206 = vld [vmem:[%s182 + $0x20] sm:$0xf]
      %v207 = vld [vmem:[%s182 + $0x24] sm:$0xf]
      %v208 = vld [vmem:[%s182 + $0x28] sm:$0xf]
      %v209 = vld [vmem:[%s182 + $0x2c] sm:$0xf]
      %v210 = vld [vmem:[%s182 + $0x30] sm:$0xf]
      %v211 = vld [vmem:[%s182 + $0x34] sm:$0xf]
      %v212 = vld [vmem:[%s182 + $0x38] sm:$0xf]
      %v213 = vld [vmem:[%s182 + $0x3c] sm:$0xf]
      %v214 = vld [vmem:[%s182 + $0x40] sm:$0xf]
      %v215 = vld [vmem:[%s182 + $0x44] sm:$0xf]
      %v216 = vld [vmem:[%s182 + $0x48] sm:$0xf]
      %v217 = vld [vmem:[%s182 + $0x4c] sm:$0xf]
      %v218 = vld [vmem:[%s182 + $0x50] sm:$0xf]
      %v219 = vld [vmem:[%s182 + $0x54] sm:$0xf]
      %v220 = vld [vmem:[%s182 + $0x58] sm:$0xf]
      %v221 = vld [vmem:[%s182 + $0x5c] sm:$0xf]
      %v222 = vld [vmem:[%s182 + $0x60] sm:$0xf]
      %v223 = vld [vmem:[%s182 + $0x64] sm:$0xf]
      %v224 = vld [vmem:[%s182 + $0x68] sm:$0xf]
      %v225 = vld [vmem:[%s182 + $0x6c] sm:$0xf]
      %v226 = vld [vmem:[%s182 + $0x70] sm:$0xf]
      %v227 = vld [vmem:[%s182 + $0x74] sm:$0xf]
      %v228 = vld [vmem:[%s182 + $0x78] sm:$0xf]
      %v229 = vld [vmem:[%s182 + $0x7c] sm:$0xf]
      %v230 = vld [vmem:[%s182 + $0x80] sm:$0xf]
      %v231 = vld [vmem:[%s182 + $0x84] sm:$0xf]
      %v232 = vld [vmem:[%s182 + $0x88] sm:$0xf]
      %v233 = vld [vmem:[%s182 + $0x8c] sm:$0xf]
      %v234 = vld [vmem:[%s182 + $0x90] sm:$0xf]
      %v235 = vld [vmem:[%s182 + $0x94] sm:$0xf]
      %v236 = vld [vmem:[%s182 + $0x98] sm:$0xf]
      %v237 = vld [vmem:[%s182 + $0x9c] sm:$0xf]
      %v238 = vld [vmem:[%s182 + $0xa0] sm:$0xf]
      %v239 = vld [vmem:[%s182 + $0xa4] sm:$0xf]
      %v240 = vld [vmem:[%s182 + $0xa8] sm:$0xf]
      %v241 = vld [vmem:[%s182 + $0xac] sm:$0xf]
      %v242 = vld [vmem:[%s182 + $0xb0] sm:$0xf]
      %v243 = vld [vmem:[%s182 + $0xb4] sm:$0xf]
      %v244 = vld [vmem:[%s182 + $0xb8] sm:$0xf]
      %v245 = vld [vmem:[%s182 + $0xbc] sm:$0xf]
      %v246 = vld [vmem:[%s182 + $0xc0] sm:$0xf]
      %v247 = vld [vmem:[%s182 + $0xc4] sm:$0xf]
      %v248 = vld [vmem:[%s182 + $0xc8] sm:$0xf]
      %v249 = vld [vmem:[%s182 + $0xcc] sm:$0xf]
      %v250 = vld [vmem:[%s182 + $0xd0] sm:$0xf]
      %v251 = vld [vmem:[%s182 + $0xd4] sm:$0xf]
      %v252 = vld [vmem:[%s182 + $0xd8] sm:$0xf]
      %v253 = vld [vmem:[%s182 + $0xdc] sm:$0xf]
      %v254 = vld [vmem:[%s182 + $0xe0] sm:$0xf]
      %v255 = vld [vmem:[%s182 + $0xe4] sm:$0xf]
      %v256 = vld [vmem:[%s182 + $0xe8] sm:$0xf]
      %v257 = vld [vmem:[%s182 + $0xec] sm:$0xf]
      %v258 = vld [vmem:[%s182 + $0xf0] sm:$0xf]
      %v259 = vld [vmem:[%s182 + $0xf4] sm:$0xf]
      %v260 = vld [vmem:[%s182 + $0xf8] sm:$0xf]
      %v261 = vld [vmem:[%s182 + $0xfc] sm:$0xf]
      %v262 = vld [vmem:[%s182 + $0x100] sm:$0xf]
      %v263 = vld [vmem:[%s182 + $0x104] sm:$0xf]
      %v264 = vld [vmem:[%s182 + $0x108] sm:$0xf]
      %v265 = vld [vmem:[%s182 + $0x10c] sm:$0xf]
      %v266 = vld [vmem:[%s182 + $0x110] sm:$0xf]
      %v267 = vld [vmem:[%s182 + $0x114] sm:$0xf]
      %v268 = vld [vmem:[%s182 + $0x118] sm:$0xf]
      %v269 = vld [vmem:[%s182 + $0x11c] sm:$0xf]
      %v270 = vld [vmem:[%s182 + $0x120] sm:$0xf]
      %v271 = vld [vmem:[%s182 + $0x124] sm:$0xf]
      %v272 = vld [vmem:[%s182 + $0x128] sm:$0xf]
      %v273 = vld [vmem:[%s182 + $0x12c] sm:$0xf]
      %v274 = vld [vmem:[%s182 + $0x130] sm:$0xf]
      %v275 = vld [vmem:[%s182 + $0x134] sm:$0xf]
      %v276 = vld [vmem:[%s182 + $0x138] sm:$0xf]
      %v277 = vld [vmem:[%s182 + $0x13c] sm:$0xf]
      %v278 = vld [vmem:[%s182 + $0x140] sm:$0xf]
      %v279 = vld [vmem:[%s182 + $0x144] sm:$0xf]
      %v280 = vld [vmem:[%s182 + $0x148] sm:$0xf]
      %v281 = vld [vmem:[%s182 + $0x14c] sm:$0xf]
      %v282 = vld [vmem:[%s182 + $0x150] sm:$0xf]
      %v283 = vld [vmem:[%s182 + $0x154] sm:$0xf]
      %v284 = vld [vmem:[%s182 + $0x158] sm:$0xf]
      %v285 = vld [vmem:[%s182 + $0x15c] sm:$0xf]
      %v286 = vld [vmem:[%s182 + $0x160] sm:$0xf]
      %v287 = vld [vmem:[%s182 + $0x164] sm:$0xf]
      %v288 = vld [vmem:[%s182 + $0x168] sm:$0xf]
      %v289 = vld [vmem:[%s182 + $0x16c] sm:$0xf]
      %v290 = vld [vmem:[%s182 + $0x170] sm:$0xf]
      %v291 = vld [vmem:[%s182 + $0x174] sm:$0xf]
      %v292 = vld [vmem:[%s182 + $0x178] sm:$0xf]
      %v293 = vld [vmem:[%s182 + $0x17c] sm:$0xf]
      %v294 = vld [vmem:[%s182 + $0x180] sm:$0xf]
      %v295 = vld [vmem:[%s182 + $0x184] sm:$0xf]
      %v296 = vld [vmem:[%s182 + $0x188] sm:$0xf]
      %v297 = vld [vmem:[%s182 + $0x18c] sm:$0xf]
      %v298 = vld [vmem:[%s182 + $0x190] sm:$0xf]
      %v299 = vld [vmem:[%s182 + $0x194] sm:$0xf]
      %v300 = vld [vmem:[%s182 + $0x198] sm:$0xf]
      %v301 = vld [vmem:[%s182 + $0x19c] sm:$0xf]
      %v302 = vld [vmem:[%s182 + $0x1a0] sm:$0xf]
      %v303 = vld [vmem:[%s182 + $0x1a4] sm:$0xf]
      %v304 = vld [vmem:[%s182 + $0x1a8] sm:$0xf]
      %v305 = vld [vmem:[%s182 + $0x1ac] sm:$0xf]
      %v306 = vld [vmem:[%s182 + $0x1b0] sm:$0xf]
      %v307 = vld [vmem:[%s182 + $0x1b4] sm:$0xf]
      %v308 = vld [vmem:[%s182 + $0x1b8] sm:$0xf]
      %v309 = vld [vmem:[%s182 + $0x1bc] sm:$0xf]
      %v310 = vld [vmem:[%s182 + $0x1c0] sm:$0xf]
      %v311 = vld [vmem:[%s182 + $0x1c4] sm:$0xf]
      %v312 = vld [vmem:[%s182 + $0x1c8] sm:$0xf]
      %v313 = vld [vmem:[%s182 + $0x1cc] sm:$0xf]
      %v314 = vld [vmem:[%s182 + $0x1d0] sm:$0xf]
      %v315 = vld [vmem:[%s182 + $0x1d4] sm:$0xf]
      %v316 = vld [vmem:[%s182 + $0x1d8] sm:$0xf]
      %v317 = vld [vmem:[%s182 + $0x1dc] sm:$0xf]
      %v318 = vld [vmem:[%s182 + $0x1e0] sm:$0xf]
      %v319 = vld [vmem:[%s182 + $0x1e4] sm:$0xf]
      %v320 = vld [vmem:[%s182 + $0x1e8] sm:$0xf]
      %v321 = vld [vmem:[%s182 + $0x1ec] sm:$0xf]
      %v322 = vld [vmem:[%s182 + $0x1f0] sm:$0xf]
      %v323 = vld [vmem:[%s182 + $0x1f4] sm:$0xf]
      %v324 = vld [vmem:[%s182 + $0x1f8] sm:$0xf]
      %v325 = vld [vmem:[%s182 + $0x1fc] sm:$0xf]
      %v326 = vunpack.c.l.bf16 %v198
      %v327 = vunpack.c.l.bf16 %v199
      %v328 = vunpack.c.l.bf16 %v200
      %v329 = vunpack.c.l.bf16 %v201
      %v330 = vunpack.c.l.bf16 %v202
      %v331 = vunpack.c.l.bf16 %v203
      %v332 = vunpack.c.l.bf16 %v204
      %v333 = vunpack.c.l.bf16 %v205
      %v334 = vunpack.c.l.bf16 %v206
      %v335 = vunpack.c.l.bf16 %v207
      %v336 = vunpack.c.l.bf16 %v208
      %v337 = vunpack.c.l.bf16 %v209
      %v338 = vunpack.c.l.bf16 %v210
      %v339 = vunpack.c.l.bf16 %v211
      %v340 = vunpack.c.l.bf16 %v212
      %v341 = vunpack.c.l.bf16 %v213
      %v342 = vunpack.c.l.bf16 %v214
      %v343 = vunpack.c.l.bf16 %v215
      %v344 = vunpack.c.l.bf16 %v216
      %v345 = vunpack.c.l.bf16 %v217
      %v346 = vunpack.c.l.bf16 %v218
      %v347 = vunpack.c.l.bf16 %v219
      %v348 = vunpack.c.l.bf16 %v220
      %v349 = vunpack.c.l.bf16 %v221
      %v350 = vunpack.c.l.bf16 %v222
      %v351 = vunpack.c.l.bf16 %v223
      %v352 = vunpack.c.l.bf16 %v224
      %v353 = vunpack.c.l.bf16 %v225
      %v354 = vunpack.c.l.bf16 %v226
      %v355 = vunpack.c.l.bf16 %v227
      %v356 = vunpack.c.l.bf16 %v228
      %v357 = vunpack.c.l.bf16 %v229
      %v358 = vunpack.c.l.bf16 %v230
      %v359 = vunpack.c.l.bf16 %v231
      %v360 = vunpack.c.l.bf16 %v232
      %v361 = vunpack.c.l.bf16 %v233
      %v362 = vunpack.c.l.bf16 %v234
      %v363 = vunpack.c.l.bf16 %v235
      %v364 = vunpack.c.l.bf16 %v236
      %v365 = vunpack.c.l.bf16 %v237
      %v366 = vunpack.c.l.bf16 %v238
      %v367 = vunpack.c.l.bf16 %v239
      %v368 = vunpack.c.l.bf16 %v240
      %v369 = vunpack.c.l.bf16 %v241
      %v370 = vunpack.c.l.bf16 %v242
      %v371 = vunpack.c.l.bf16 %v243
      %v372 = vunpack.c.l.bf16 %v244
      %v373 = vunpack.c.l.bf16 %v245
      %v374 = vunpack.c.l.bf16 %v246
      %v375 = vunpack.c.l.bf16 %v247
      %v376 = vunpack.c.l.bf16 %v248
      %v377 = vunpack.c.l.bf16 %v249
      %v378 = vunpack.c.l.bf16 %v250
      %v379 = vunpack.c.l.bf16 %v251
      %v380 = vunpack.c.l.bf16 %v252
      %v381 = vunpack.c.l.bf16 %v253
      %v382 = vunpack.c.l.bf16 %v254
      %v383 = vunpack.c.l.bf16 %v255
      %v384 = vunpack.c.l.bf16 %v256
      %v385 = vunpack.c.l.bf16 %v257
      %v386 = vunpack.c.l.bf16 %v258
      %v387 = vunpack.c.l.bf16 %v259
      %v388 = vunpack.c.l.bf16 %v260
      %v389 = vunpack.c.l.bf16 %v261
      %v390 = vunpack.c.l.bf16 %v262
      %v391 = vunpack.c.l.bf16 %v263
      %v392 = vunpack.c.l.bf16 %v264
      %v393 = vunpack.c.l.bf16 %v265
      %v394 = vunpack.c.l.bf16 %v266
      %v395 = vunpack.c.l.bf16 %v267
      %v396 = vunpack.c.l.bf16 %v268
      %v397 = vunpack.c.l.bf16 %v269
      %v398 = vunpack.c.l.bf16 %v270
      %v399 = vunpack.c.l.bf16 %v271
      %v400 = vunpack.c.l.bf16 %v272
      %v401 = vunpack.c.l.bf16 %v273
      %v402 = vunpack.c.l.bf16 %v274
      %v403 = vunpack.c.l.bf16 %v275
      %v404 = vunpack.c.l.bf16 %v276
      %v405 = vunpack.c.l.bf16 %v277
      %v406 = vunpack.c.l.bf16 %v278
      %v407 = vunpack.c.l.bf16 %v279
      %v408 = vunpack.c.l.bf16 %v280
      %v409 = vunpack.c.l.bf16 %v281
      %v410 = vunpack.c.l.bf16 %v282
      %v411 = vunpack.c.l.bf16 %v283
      %v412 = vunpack.c.l.bf16 %v284
      %v413 = vunpack.c.l.bf16 %v285
      %v414 = vunpack.c.l.bf16 %v286
      %v415 = vunpack.c.l.bf16 %v287
      %v416 = vunpack.c.l.bf16 %v288
      %v417 = vunpack.c.l.bf16 %v289
      %v418 = vunpack.c.l.bf16 %v290
      %v419 = vunpack.c.l.bf16 %v291
      %v420 = vunpack.c.l.bf16 %v292
      %v421 = vunpack.c.l.bf16 %v293
      %v422 = vunpack.c.l.bf16 %v294
      %v423 = vunpack.c.l.bf16 %v295
      %v424 = vunpack.c.l.bf16 %v296
      %v425 = vunpack.c.l.bf16 %v297
      %v426 = vunpack.c.l.bf16 %v298
      %v427 = vunpack.c.l.bf16 %v299
      %v428 = vunpack.c.l.bf16 %v300
      %v429 = vunpack.c.l.bf16 %v301
      %v430 = vunpack.c.l.bf16 %v302
      %v431 = vunpack.c.l.bf16 %v303
      %v432 = vunpack.c.l.bf16 %v304
      %v433 = vunpack.c.l.bf16 %v305
      %v434 = vunpack.c.l.bf16 %v306
      %v435 = vunpack.c.l.bf16 %v307
      %v436 = vunpack.c.l.bf16 %v308
      %v437 = vunpack.c.l.bf16 %v309
      %v438 = vunpack.c.l.bf16 %v310
      %v439 = vunpack.c.l.bf16 %v311
      %v440 = vunpack.c.l.bf16 %v312
      %v441 = vunpack.c.l.bf16 %v313
      %v442 = vunpack.c.l.bf16 %v314
      %v443 = vunpack.c.l.bf16 %v315
      %v444 = vunpack.c.l.bf16 %v316
      %v445 = vunpack.c.l.bf16 %v317
      %v446 = vunpack.c.l.bf16 %v318
      %v447 = vunpack.c.l.bf16 %v319
      %v448 = vunpack.c.l.bf16 %v320
      %v449 = vunpack.c.l.bf16 %v321
      %v450 = vunpack.c.l.bf16 %v322
      %v451 = vunpack.c.l.bf16 %v323
      %v452 = vunpack.c.l.bf16 %v324
      %v453 = vunpack.c.l.bf16 %v325
      %v454 = vlaneseq
      %v455 = vshrl.u32 %v454, 7
      %v456 = vsub.s32 0, %v455
      %v457 = vrot.slane %v196, %v456
      %v458 = vmul.f32 %v326, %v457
      %v459 = vmul.f32 %v327, %v457
      %v460 = vmul.f32 %v328, %v457
      %v461 = vmul.f32 %v329, %v457
      %v462 = vmul.f32 %v330, %v457
      %v463 = vmul.f32 %v331, %v457
      %v464 = vmul.f32 %v332, %v457
      %v465 = vmul.f32 %v333, %v457
      %v466 = vmul.f32 %v334, %v457
      %v467 = vmul.f32 %v335, %v457
      %v468 = vmul.f32 %v336, %v457
      %v469 = vmul.f32 %v337, %v457
      %v470 = vmul.f32 %v338, %v457
      %v471 = vmul.f32 %v339, %v457
      %v472 = vmul.f32 %v340, %v457
      %v473 = vmul.f32 %v341, %v457
      %v474 = vmul.f32 %v342, %v457
      %v475 = vmul.f32 %v343, %v457
      %v476 = vmul.f32 %v344, %v457
      %v477 = vmul.f32 %v345, %v457
      %v478 = vmul.f32 %v346, %v457
      %v479 = vmul.f32 %v347, %v457
      %v480 = vmul.f32 %v348, %v457
      %v481 = vmul.f32 %v349, %v457
      %v482 = vmul.f32 %v350, %v457
      %v483 = vmul.f32 %v351, %v457
      %v484 = vmul.f32 %v352, %v457
      %v485 = vmul.f32 %v353, %v457
      %v486 = vmul.f32 %v354, %v457
      %v487 = vmul.f32 %v355, %v457
      %v488 = vmul.f32 %v356, %v457
      %v489 = vmul.f32 %v357, %v457
      %v490 = vmul.f32 %v358, %v457
      %v491 = vmul.f32 %v359, %v457
      %v492 = vmul.f32 %v360, %v457
      %v493 = vmul.f32 %v361, %v457
      %v494 = vmul.f32 %v362, %v457
      %v495 = vmul.f32 %v363, %v457
      %v496 = vmul.f32 %v364, %v457
      %v497 = vmul.f32 %v365, %v457
      %v498 = vmul.f32 %v366, %v457
      %v499 = vmul.f32 %v367, %v457
      %v500 = vmul.f32 %v368, %v457
      %v501 = vmul.f32 %v369, %v457
      %v502 = vmul.f32 %v370, %v457
      %v503 = vmul.f32 %v371, %v457
      %v504 = vmul.f32 %v372, %v457
      %v505 = vmul.f32 %v373, %v457
      %v506 = vmul.f32 %v374, %v457
      %v507 = vmul.f32 %v375, %v457
      %v508 = vmul.f32 %v376, %v457
      %v509 = vmul.f32 %v377, %v457
      %v510 = vmul.f32 %v378, %v457
      %v511 = vmul.f32 %v379, %v457
      %v512 = vmul.f32 %v380, %v457
      %v513 = vmul.f32 %v381, %v457
      %v514 = vmul.f32 %v382, %v457
      %v515 = vmul.f32 %v383, %v457
      %v516 = vmul.f32 %v384, %v457
      %v517 = vmul.f32 %v385, %v457
      %v518 = vmul.f32 %v386, %v457
      %v519 = vmul.f32 %v387, %v457
      %v520 = vmul.f32 %v388, %v457
      %v521 = vmul.f32 %v389, %v457
      %v522 = vmul.f32 %v390, %v457
      %v523 = vmul.f32 %v391, %v457
      %v524 = vmul.f32 %v392, %v457
      %v525 = vmul.f32 %v393, %v457
      %v526 = vmul.f32 %v394, %v457
      %v527 = vmul.f32 %v395, %v457
      %v528 = vmul.f32 %v396, %v457
      %v529 = vmul.f32 %v397, %v457
      %v530 = vmul.f32 %v398, %v457
      %v531 = vmul.f32 %v399, %v457
      %v532 = vmul.f32 %v400, %v457
      %v533 = vmul.f32 %v401, %v457
      %v534 = vmul.f32 %v402, %v457
      %v535 = vmul.f32 %v403, %v457
      %v536 = vmul.f32 %v404, %v457
      %v537 = vmul.f32 %v405, %v457
      %v538 = vmul.f32 %v406, %v457
      %v539 = vmul.f32 %v407, %v457
      %v540 = vmul.f32 %v408, %v457
      %v541 = vmul.f32 %v409, %v457
      %v542 = vmul.f32 %v410, %v457
      %v543 = vmul.f32 %v411, %v457
      %v544 = vmul.f32 %v412, %v457
      %v545 = vmul.f32 %v413, %v457
      %v546 = vmul.f32 %v414, %v457
      %v547 = vmul.f32 %v415, %v457
      %v548 = vmul.f32 %v416, %v457
      %v549 = vmul.f32 %v417, %v457
      %v550 = vmul.f32 %v418, %v457
      %v551 = vmul.f32 %v419, %v457
      %v552 = vmul.f32 %v420, %v457
      %v553 = vmul.f32 %v421, %v457
      %v554 = vmul.f32 %v422, %v457
      %v555 = vmul.f32 %v423, %v457
      %v556 = vmul.f32 %v424, %v457
      %v557 = vmul.f32 %v425, %v457
      %v558 = vmul.f32 %v426, %v457
      %v559 = vmul.f32 %v427, %v457
      %v560 = vmul.f32 %v428, %v457
      %v561 = vmul.f32 %v429, %v457
      %v562 = vmul.f32 %v430, %v457
      %v563 = vmul.f32 %v431, %v457
      %v564 = vmul.f32 %v432, %v457
      %v565 = vmul.f32 %v433, %v457
      %v566 = vmul.f32 %v434, %v457
      %v567 = vmul.f32 %v435, %v457
      %v568 = vmul.f32 %v436, %v457
      %v569 = vmul.f32 %v437, %v457
      %v570 = vmul.f32 %v438, %v457
      %v571 = vmul.f32 %v439, %v457
      %v572 = vmul.f32 %v440, %v457
      %v573 = vmul.f32 %v441, %v457
      %v574 = vmul.f32 %v442, %v457
      %v575 = vmul.f32 %v443, %v457
      %v576 = vmul.f32 %v444, %v457
      %v577 = vmul.f32 %v445, %v457
      %v578 = vmul.f32 %v446, %v457
      %v579 = vmul.f32 %v447, %v457
      %v580 = vmul.f32 %v448, %v457
      %v581 = vmul.f32 %v449, %v457
      %v582 = vmul.f32 %v450, %v457
      %v583 = vmul.f32 %v451, %v457
      %v584 = vmul.f32 %v452, %v457
      %v585 = vmul.f32 %v453, %v457
      %v586 = vlaneseq
      %v587 = vshrl.u32 %v586, 7
      %v588 = vsub.s32 0, %v587
      %v589 = vrot.slane %v197, %v588
      %v590 = vadd.f32 %v458, %v589
      %v591 = vadd.f32 %v459, %v589
      %v592 = vadd.f32 %v460, %v589
      %v593 = vadd.f32 %v461, %v589
      %v594 = vadd.f32 %v462, %v589
      %v595 = vadd.f32 %v463, %v589
      %v596 = vadd.f32 %v464, %v589
      %v597 = vadd.f32 %v465, %v589
      %v598 = vadd.f32 %v466, %v589
      %v599 = vadd.f32 %v467, %v589
      %v600 = vadd.f32 %v468, %v589
      %v601 = vadd.f32 %v469, %v589
      %v602 = vadd.f32 %v470, %v589
      %v603 = vadd.f32 %v471, %v589
      %v604 = vadd.f32 %v472, %v589
      %v605 = vadd.f32 %v473, %v589
      %v606 = vadd.f32 %v474, %v589
      %v607 = vadd.f32 %v475, %v589
      %v608 = vadd.f32 %v476, %v589
      %v609 = vadd.f32 %v477, %v589
      %v610 = vadd.f32 %v478, %v589
      %v611 = vadd.f32 %v479, %v589
      %v612 = vadd.f32 %v480, %v589
      %v613 = vadd.f32 %v481, %v589
      %v614 = vadd.f32 %v482, %v589
      %v615 = vadd.f32 %v483, %v589
      %v616 = vadd.f32 %v484, %v589
      %v617 = vadd.f32 %v485, %v589
      %v618 = vadd.f32 %v486, %v589
      %v619 = vadd.f32 %v487, %v589
      %v620 = vadd.f32 %v488, %v589
      %v621 = vadd.f32 %v489, %v589
      %v622 = vadd.f32 %v490, %v589
      %v623 = vadd.f32 %v491, %v589
      %v624 = vadd.f32 %v492, %v589
      %v625 = vadd.f32 %v493, %v589
      %v626 = vadd.f32 %v494, %v589
      %v627 = vadd.f32 %v495, %v589
      %v628 = vadd.f32 %v496, %v589
      %v629 = vadd.f32 %v497, %v589
      %v630 = vadd.f32 %v498, %v589
      %v631 = vadd.f32 %v499, %v589
      %v632 = vadd.f32 %v500, %v589
      %v633 = vadd.f32 %v501, %v589
      %v634 = vadd.f32 %v502, %v589
      %v635 = vadd.f32 %v503, %v589
      %v636 = vadd.f32 %v504, %v589
      %v637 = vadd.f32 %v505, %v589
      %v638 = vadd.f32 %v506, %v589
      %v639 = vadd.f32 %v507, %v589
      %v640 = vadd.f32 %v508, %v589
      %v641 = vadd.f32 %v509, %v589
      %v642 = vadd.f32 %v510, %v589
      %v643 = vadd.f32 %v511, %v589
      %v644 = vadd.f32 %v512, %v589
      %v645 = vadd.f32 %v513, %v589
      %v646 = vadd.f32 %v514, %v589
      %v647 = vadd.f32 %v515, %v589
      %v648 = vadd.f32 %v516, %v589
      %v649 = vadd.f32 %v517, %v589
      %v650 = vadd.f32 %v518, %v589
      %v651 = vadd.f32 %v519, %v589
      %v652 = vadd.f32 %v520, %v589
      %v653 = vadd.f32 %v521, %v589
      %v654 = vadd.f32 %v522, %v589
      %v655 = vadd.f32 %v523, %v589
      %v656 = vadd.f32 %v524, %v589
      %v657 = vadd.f32 %v525, %v589
      %v658 = vadd.f32 %v526, %v589
      %v659 = vadd.f32 %v527, %v589
      %v660 = vadd.f32 %v528, %v589
      %v661 = vadd.f32 %v529, %v589
      %v662 = vadd.f32 %v530, %v589
      %v663 = vadd.f32 %v531, %v589
      %v664 = vadd.f32 %v532, %v589
      %v665 = vadd.f32 %v533, %v589
      %v666 = vadd.f32 %v534, %v589
      %v667 = vadd.f32 %v535, %v589
      %v668 = vadd.f32 %v536, %v589
      %v669 = vadd.f32 %v537, %v589
      %v670 = vadd.f32 %v538, %v589
      %v671 = vadd.f32 %v539, %v589
      %v672 = vadd.f32 %v540, %v589
      %v673 = vadd.f32 %v541, %v589
      %v674 = vadd.f32 %v542, %v589
      %v675 = vadd.f32 %v543, %v589
      %v676 = vadd.f32 %v544, %v589
      %v677 = vadd.f32 %v545, %v589
      %v678 = vadd.f32 %v546, %v589
      %v679 = vadd.f32 %v547, %v589
      %v680 = vadd.f32 %v548, %v589
      %v681 = vadd.f32 %v549, %v589
      %v682 = vadd.f32 %v550, %v589
      %v683 = vadd.f32 %v551, %v589
      %v684 = vadd.f32 %v552, %v589
      %v685 = vadd.f32 %v553, %v589
      %v686 = vadd.f32 %v554, %v589
      %v687 = vadd.f32 %v555, %v589
      %v688 = vadd.f32 %v556, %v589
      %v689 = vadd.f32 %v557, %v589
      %v690 = vadd.f32 %v558, %v589
      %v691 = vadd.f32 %v559, %v589
      %v692 = vadd.f32 %v560, %v589
      %v693 = vadd.f32 %v561, %v589
      %v694 = vadd.f32 %v562, %v589
      %v695 = vadd.f32 %v563, %v589
      %v696 = vadd.f32 %v564, %v589
      %v697 = vadd.f32 %v565, %v589
      %v698 = vadd.f32 %v566, %v589
      %v699 = vadd.f32 %v567, %v589
      %v700 = vadd.f32 %v568, %v589
      %v701 = vadd.f32 %v569, %v589
      %v702 = vadd.f32 %v570, %v589
      %v703 = vadd.f32 %v571, %v589
      %v704 = vadd.f32 %v572, %v589
      %v705 = vadd.f32 %v573, %v589
      %v706 = vadd.f32 %v574, %v589
      %v707 = vadd.f32 %v575, %v589
      %v708 = vadd.f32 %v576, %v589
      %v709 = vadd.f32 %v577, %v589
      %v710 = vadd.f32 %v578, %v589
      %v711 = vadd.f32 %v579, %v589
      %v712 = vadd.f32 %v580, %v589
      %v713 = vadd.f32 %v581, %v589
      %v714 = vadd.f32 %v582, %v589
      %v715 = vadd.f32 %v583, %v589
      %v716 = vadd.f32 %v584, %v589
      %v717 = vadd.f32 %v585, %v589
      %v718 = vld [vmem:[%s188] sm:$0xf]
      %v719 = vld [vmem:[%s188 + $0x4] sm:$0xf]
      %v720 = vld [vmem:[%s188 + $0x8] sm:$0xf]
      %v721 = vld [vmem:[%s188 + $0xc] sm:$0xf]
      %v722 = vld [vmem:[%s188 + $0x10] sm:$0xf]
      %v723 = vld [vmem:[%s188 + $0x14] sm:$0xf]
      %v724 = vld [vmem:[%s188 + $0x18] sm:$0xf]
      %v725 = vld [vmem:[%s188 + $0x1c] sm:$0xf]
      %v726 = vld [vmem:[%s188 + $0x20] sm:$0xf]
      %v727 = vld [vmem:[%s188 + $0x24] sm:$0xf]
      %v728 = vld [vmem:[%s188 + $0x28] sm:$0xf]
      %v729 = vld [vmem:[%s188 + $0x2c] sm:$0xf]
      %v730 = vld [vmem:[%s188 + $0x30] sm:$0xf]
      %v731 = vld [vmem:[%s188 + $0x34] sm:$0xf]
      %v732 = vld [vmem:[%s188 + $0x38] sm:$0xf]
      %v733 = vld [vmem:[%s188 + $0x3c] sm:$0xf]
      %v734 = vld [vmem:[%s188 + $0x40] sm:$0xf]
      %v735 = vld [vmem:[%s188 + $0x44] sm:$0xf]
      %v736 = vld [vmem:[%s188 + $0x48] sm:$0xf]
      %v737 = vld [vmem:[%s188 + $0x4c] sm:$0xf]
      %v738 = vld [vmem:[%s188 + $0x50] sm:$0xf]
      %v739 = vld [vmem:[%s188 + $0x54] sm:$0xf]
      %v740 = vld [vmem:[%s188 + $0x58] sm:$0xf]
      %v741 = vld [vmem:[%s188 + $0x5c] sm:$0xf]
      %v742 = vld [vmem:[%s188 + $0x60] sm:$0xf]
      %v743 = vld [vmem:[%s188 + $0x64] sm:$0xf]
      %v744 = vld [vmem:[%s188 + $0x68] sm:$0xf]
      %v745 = vld [vmem:[%s188 + $0x6c] sm:$0xf]
      %v746 = vld [vmem:[%s188 + $0x70] sm:$0xf]
      %v747 = vld [vmem:[%s188 + $0x74] sm:$0xf]
      %v748 = vld [vmem:[%s188 + $0x78] sm:$0xf]
      %v749 = vld [vmem:[%s188 + $0x7c] sm:$0xf]
      %v750 = vld [vmem:[%s188 + $0x80] sm:$0xf]
      %v751 = vld [vmem:[%s188 + $0x84] sm:$0xf]
      %v752 = vld [vmem:[%s188 + $0x88] sm:$0xf]
      %v753 = vld [vmem:[%s188 + $0x8c] sm:$0xf]
      %v754 = vld [vmem:[%s188 + $0x90] sm:$0xf]
      %v755 = vld [vmem:[%s188 + $0x94] sm:$0xf]
      %v756 = vld [vmem:[%s188 + $0x98] sm:$0xf]
      %v757 = vld [vmem:[%s188 + $0x9c] sm:$0xf]
      %v758 = vld [vmem:[%s188 + $0xa0] sm:$0xf]
      %v759 = vld [vmem:[%s188 + $0xa4] sm:$0xf]
      %v760 = vld [vmem:[%s188 + $0xa8] sm:$0xf]
      %v761 = vld [vmem:[%s188 + $0xac] sm:$0xf]
      %v762 = vld [vmem:[%s188 + $0xb0] sm:$0xf]
      %v763 = vld [vmem:[%s188 + $0xb4] sm:$0xf]
      %v764 = vld [vmem:[%s188 + $0xb8] sm:$0xf]
      %v765 = vld [vmem:[%s188 + $0xbc] sm:$0xf]
      %v766 = vld [vmem:[%s188 + $0xc0] sm:$0xf]
      %v767 = vld [vmem:[%s188 + $0xc4] sm:$0xf]
      %v768 = vld [vmem:[%s188 + $0xc8] sm:$0xf]
      %v769 = vld [vmem:[%s188 + $0xcc] sm:$0xf]
      %v770 = vld [vmem:[%s188 + $0xd0] sm:$0xf]
      %v771 = vld [vmem:[%s188 + $0xd4] sm:$0xf]
      %v772 = vld [vmem:[%s188 + $0xd8] sm:$0xf]
      %v773 = vld [vmem:[%s188 + $0xdc] sm:$0xf]
      %v774 = vld [vmem:[%s188 + $0xe0] sm:$0xf]
      %v775 = vld [vmem:[%s188 + $0xe4] sm:$0xf]
      %v776 = vld [vmem:[%s188 + $0xe8] sm:$0xf]
      %v777 = vld [vmem:[%s188 + $0xec] sm:$0xf]
      %v778 = vld [vmem:[%s188 + $0xf0] sm:$0xf]
      %v779 = vld [vmem:[%s188 + $0xf4] sm:$0xf]
      %v780 = vld [vmem:[%s188 + $0xf8] sm:$0xf]
      %v781 = vld [vmem:[%s188 + $0xfc] sm:$0xf]
      %v782 = vld [vmem:[%s188 + $0x100] sm:$0xf]
      %v783 = vld [vmem:[%s188 + $0x104] sm:$0xf]
      %v784 = vld [vmem:[%s188 + $0x108] sm:$0xf]
      %v785 = vld [vmem:[%s188 + $0x10c] sm:$0xf]
      %v786 = vld [vmem:[%s188 + $0x110] sm:$0xf]
      %v787 = vld [vmem:[%s188 + $0x114] sm:$0xf]
      %v788 = vld [vmem:[%s188 + $0x118] sm:$0xf]
      %v789 = vld [vmem:[%s188 + $0x11c] sm:$0xf]
      %v790 = vld [vmem:[%s188 + $0x120] sm:$0xf]
      %v791 = vld [vmem:[%s188 + $0x124] sm:$0xf]
      %v792 = vld [vmem:[%s188 + $0x128] sm:$0xf]
      %v793 = vld [vmem:[%s188 + $0x12c] sm:$0xf]
      %v794 = vld [vmem:[%s188 + $0x130] sm:$0xf]
      %v795 = vld [vmem:[%s188 + $0x134] sm:$0xf]
      %v796 = vld [vmem:[%s188 + $0x138] sm:$0xf]
      %v797 = vld [vmem:[%s188 + $0x13c] sm:$0xf]
      %v798 = vld [vmem:[%s188 + $0x140] sm:$0xf]
      %v799 = vld [vmem:[%s188 + $0x144] sm:$0xf]
      %v800 = vld [vmem:[%s188 + $0x148] sm:$0xf]
      %v801 = vld [vmem:[%s188 + $0x14c] sm:$0xf]
      %v802 = vld [vmem:[%s188 + $0x150] sm:$0xf]
      %v803 = vld [vmem:[%s188 + $0x154] sm:$0xf]
      %v804 = vld [vmem:[%s188 + $0x158] sm:$0xf]
      %v805 = vld [vmem:[%s188 + $0x15c] sm:$0xf]
      %v806 = vld [vmem:[%s188 + $0x160] sm:$0xf]
      %v807 = vld [vmem:[%s188 + $0x164] sm:$0xf]
      %v808 = vld [vmem:[%s188 + $0x168] sm:$0xf]
      %v809 = vld [vmem:[%s188 + $0x16c] sm:$0xf]
      %v810 = vld [vmem:[%s188 + $0x170] sm:$0xf]
      %v811 = vld [vmem:[%s188 + $0x174] sm:$0xf]
      %v812 = vld [vmem:[%s188 + $0x178] sm:$0xf]
      %v813 = vld [vmem:[%s188 + $0x17c] sm:$0xf]
      %v814 = vld [vmem:[%s188 + $0x180] sm:$0xf]
      %v815 = vld [vmem:[%s188 + $0x184] sm:$0xf]
      %v816 = vld [vmem:[%s188 + $0x188] sm:$0xf]
      %v817 = vld [vmem:[%s188 + $0x18c] sm:$0xf]
      %v818 = vld [vmem:[%s188 + $0x190] sm:$0xf]
      %v819 = vld [vmem:[%s188 + $0x194] sm:$0xf]
      %v820 = vld [vmem:[%s188 + $0x198] sm:$0xf]
      %v821 = vld [vmem:[%s188 + $0x19c] sm:$0xf]
      %v822 = vld [vmem:[%s188 + $0x1a0] sm:$0xf]
      %v823 = vld [vmem:[%s188 + $0x1a4] sm:$0xf]
      %v824 = vld [vmem:[%s188 + $0x1a8] sm:$0xf]
      %v825 = vld [vmem:[%s188 + $0x1ac] sm:$0xf]
      %v826 = vld [vmem:[%s188 + $0x1b0] sm:$0xf]
      %v827 = vld [vmem:[%s188 + $0x1b4] sm:$0xf]
      %v828 = vld [vmem:[%s188 + $0x1b8] sm:$0xf]
      %v829 = vld [vmem:[%s188 + $0x1bc] sm:$0xf]
      %v830 = vld [vmem:[%s188 + $0x1c0] sm:$0xf]
      %v831 = vld [vmem:[%s188 + $0x1c4] sm:$0xf]
      %v832 = vld [vmem:[%s188 + $0x1c8] sm:$0xf]
      %v833 = vld [vmem:[%s188 + $0x1cc] sm:$0xf]
      %v834 = vld [vmem:[%s188 + $0x1d0] sm:$0xf]
      %v835 = vld [vmem:[%s188 + $0x1d4] sm:$0xf]
      %v836 = vld [vmem:[%s188 + $0x1d8] sm:$0xf]
      %v837 = vld [vmem:[%s188 + $0x1dc] sm:$0xf]
      %v838 = vld [vmem:[%s188 + $0x1e0] sm:$0xf]
      %v839 = vld [vmem:[%s188 + $0x1e4] sm:$0xf]
      %v840 = vld [vmem:[%s188 + $0x1e8] sm:$0xf]
      %v841 = vld [vmem:[%s188 + $0x1ec] sm:$0xf]
      %v842 = vld [vmem:[%s188 + $0x1f0] sm:$0xf]
      %v843 = vld [vmem:[%s188 + $0x1f4] sm:$0xf]
      %v844 = vld [vmem:[%s188 + $0x1f8] sm:$0xf]
      %v845 = vld [vmem:[%s188 + $0x1fc] sm:$0xf]
      %v846 = vunpack.c.l.bf16 %v718
      %v847 = vunpack.c.l.bf16 %v719
      %v848 = vunpack.c.l.bf16 %v720
      %v849 = vunpack.c.l.bf16 %v721
      %v850 = vunpack.c.l.bf16 %v722
      %v851 = vunpack.c.l.bf16 %v723
      %v852 = vunpack.c.l.bf16 %v724
      %v853 = vunpack.c.l.bf16 %v725
      %v854 = vunpack.c.l.bf16 %v726
      %v855 = vunpack.c.l.bf16 %v727
      %v856 = vunpack.c.l.bf16 %v728
      %v857 = vunpack.c.l.bf16 %v729
      %v858 = vunpack.c.l.bf16 %v730
      %v859 = vunpack.c.l.bf16 %v731
      %v860 = vunpack.c.l.bf16 %v732
      %v861 = vunpack.c.l.bf16 %v733
      %v862 = vunpack.c.l.bf16 %v734
      %v863 = vunpack.c.l.bf16 %v735
      %v864 = vunpack.c.l.bf16 %v736
      %v865 = vunpack.c.l.bf16 %v737
      %v866 = vunpack.c.l.bf16 %v738
      %v867 = vunpack.c.l.bf16 %v739
      %v868 = vunpack.c.l.bf16 %v740
      %v869 = vunpack.c.l.bf16 %v741
      %v870 = vunpack.c.l.bf16 %v742
      %v871 = vunpack.c.l.bf16 %v743
      %v872 = vunpack.c.l.bf16 %v744
      %v873 = vunpack.c.l.bf16 %v745
      %v874 = vunpack.c.l.bf16 %v746
      %v875 = vunpack.c.l.bf16 %v747
      %v876 = vunpack.c.l.bf16 %v748
      %v877 = vunpack.c.l.bf16 %v749
      %v878 = vunpack.c.l.bf16 %v750
      %v879 = vunpack.c.l.bf16 %v751
      %v880 = vunpack.c.l.bf16 %v752
      %v881 = vunpack.c.l.bf16 %v753
      %v882 = vunpack.c.l.bf16 %v754
      %v883 = vunpack.c.l.bf16 %v755
      %v884 = vunpack.c.l.bf16 %v756
      %v885 = vunpack.c.l.bf16 %v757
      %v886 = vunpack.c.l.bf16 %v758
      %v887 = vunpack.c.l.bf16 %v759
      %v888 = vunpack.c.l.bf16 %v760
      %v889 = vunpack.c.l.bf16 %v761
      %v890 = vunpack.c.l.bf16 %v762
      %v891 = vunpack.c.l.bf16 %v763
      %v892 = vunpack.c.l.bf16 %v764
      %v893 = vunpack.c.l.bf16 %v765
      %v894 = vunpack.c.l.bf16 %v766
      %v895 = vunpack.c.l.bf16 %v767
      %v896 = vunpack.c.l.bf16 %v768
      %v897 = vunpack.c.l.bf16 %v769
      %v898 = vunpack.c.l.bf16 %v770
      %v899 = vunpack.c.l.bf16 %v771
      %v900 = vunpack.c.l.bf16 %v772
      %v901 = vunpack.c.l.bf16 %v773
      %v902 = vunpack.c.l.bf16 %v774
      %v903 = vunpack.c.l.bf16 %v775
      %v904 = vunpack.c.l.bf16 %v776
      %v905 = vunpack.c.l.bf16 %v777
      %v906 = vunpack.c.l.bf16 %v778
      %v907 = vunpack.c.l.bf16 %v779
      %v908 = vunpack.c.l.bf16 %v780
      %v909 = vunpack.c.l.bf16 %v781
      %v910 = vunpack.c.l.bf16 %v782
      %v911 = vunpack.c.l.bf16 %v783
      %v912 = vunpack.c.l.bf16 %v784
      %v913 = vunpack.c.l.bf16 %v785
      %v914 = vunpack.c.l.bf16 %v786
      %v915 = vunpack.c.l.bf16 %v787
      %v916 = vunpack.c.l.bf16 %v788
      %v917 = vunpack.c.l.bf16 %v789
      %v918 = vunpack.c.l.bf16 %v790
      %v919 = vunpack.c.l.bf16 %v791
      %v920 = vunpack.c.l.bf16 %v792
      %v921 = vunpack.c.l.bf16 %v793
      %v922 = vunpack.c.l.bf16 %v794
      %v923 = vunpack.c.l.bf16 %v795
      %v924 = vunpack.c.l.bf16 %v796
      %v925 = vunpack.c.l.bf16 %v797
      %v926 = vunpack.c.l.bf16 %v798
      %v927 = vunpack.c.l.bf16 %v799
      %v928 = vunpack.c.l.bf16 %v800
      %v929 = vunpack.c.l.bf16 %v801
      %v930 = vunpack.c.l.bf16 %v802
      %v931 = vunpack.c.l.bf16 %v803
      %v932 = vunpack.c.l.bf16 %v804
      %v933 = vunpack.c.l.bf16 %v805
      %v934 = vunpack.c.l.bf16 %v806
      %v935 = vunpack.c.l.bf16 %v807
      %v936 = vunpack.c.l.bf16 %v808
      %v937 = vunpack.c.l.bf16 %v809
      %v938 = vunpack.c.l.bf16 %v810
      %v939 = vunpack.c.l.bf16 %v811
      %v940 = vunpack.c.l.bf16 %v812
      %v941 = vunpack.c.l.bf16 %v813
      %v942 = vunpack.c.l.bf16 %v814
      %v943 = vunpack.c.l.bf16 %v815
      %v944 = vunpack.c.l.bf16 %v816
      %v945 = vunpack.c.l.bf16 %v817
      %v946 = vunpack.c.l.bf16 %v818
      %v947 = vunpack.c.l.bf16 %v819
      %v948 = vunpack.c.l.bf16 %v820
      %v949 = vunpack.c.l.bf16 %v821
      %v950 = vunpack.c.l.bf16 %v822
      %v951 = vunpack.c.l.bf16 %v823
      %v952 = vunpack.c.l.bf16 %v824
      %v953 = vunpack.c.l.bf16 %v825
      %v954 = vunpack.c.l.bf16 %v826
      %v955 = vunpack.c.l.bf16 %v827
      %v956 = vunpack.c.l.bf16 %v828
      %v957 = vunpack.c.l.bf16 %v829
      %v958 = vunpack.c.l.bf16 %v830
      %v959 = vunpack.c.l.bf16 %v831
      %v960 = vunpack.c.l.bf16 %v832
      %v961 = vunpack.c.l.bf16 %v833
      %v962 = vunpack.c.l.bf16 %v834
      %v963 = vunpack.c.l.bf16 %v835
      %v964 = vunpack.c.l.bf16 %v836
      %v965 = vunpack.c.l.bf16 %v837
      %v966 = vunpack.c.l.bf16 %v838
      %v967 = vunpack.c.l.bf16 %v839
      %v968 = vunpack.c.l.bf16 %v840
      %v969 = vunpack.c.l.bf16 %v841
      %v970 = vunpack.c.l.bf16 %v842
      %v971 = vunpack.c.l.bf16 %v843
      %v972 = vunpack.c.l.bf16 %v844
      %v973 = vunpack.c.l.bf16 %v845
      %v974 = vmul.f32 %v590, %v846
      %v975 = vmul.f32 %v591, %v847
      %v976 = vmul.f32 %v592, %v848
      %v977 = vmul.f32 %v593, %v849
      %v978 = vmul.f32 %v594, %v850
      %v979 = vmul.f32 %v595, %v851
      %v980 = vmul.f32 %v596, %v852
      %v981 = vmul.f32 %v597, %v853
      %v982 = vmul.f32 %v598, %v854
      %v983 = vmul.f32 %v599, %v855
      %v984 = vmul.f32 %v600, %v856
      %v985 = vmul.f32 %v601, %v857
      %v986 = vmul.f32 %v602, %v858
      %v987 = vmul.f32 %v603, %v859
      %v988 = vmul.f32 %v604, %v860
      %v989 = vmul.f32 %v605, %v861
      %v990 = vmul.f32 %v606, %v862
      %v991 = vmul.f32 %v607, %v863
      %v992 = vmul.f32 %v608, %v864
      %v993 = vmul.f32 %v609, %v865
      %v994 = vmul.f32 %v610, %v866
      %v995 = vmul.f32 %v611, %v867
      %v996 = vmul.f32 %v612, %v868
      %v997 = vmul.f32 %v613, %v869
      %v998 = vmul.f32 %v614, %v870
      %v999 = vmul.f32 %v615, %v871
      %v1000 = vmul.f32 %v616, %v872
      %v1001 = vmul.f32 %v617, %v873
      %v1002 = vmul.f32 %v618, %v874
      %v1003 = vmul.f32 %v619, %v875
      %v1004 = vmul.f32 %v620, %v876
      %v1005 = vmul.f32 %v621, %v877
      %v1006 = vmul.f32 %v622, %v878
      %v1007 = vmul.f32 %v623, %v879
      %v1008 = vmul.f32 %v624, %v880
      %v1009 = vmul.f32 %v625, %v881
      %v1010 = vmul.f32 %v626, %v882
      %v1011 = vmul.f32 %v627, %v883
      %v1012 = vmul.f32 %v628, %v884
      %v1013 = vmul.f32 %v629, %v885
      %v1014 = vmul.f32 %v630, %v886
      %v1015 = vmul.f32 %v631, %v887
      %v1016 = vmul.f32 %v632, %v888
      %v1017 = vmul.f32 %v633, %v889
      %v1018 = vmul.f32 %v634, %v890
      %v1019 = vmul.f32 %v635, %v891
      %v1020 = vmul.f32 %v636, %v892
      %v1021 = vmul.f32 %v637, %v893
      %v1022 = vmul.f32 %v638, %v894
      %v1023 = vmul.f32 %v639, %v895
      %v1024 = vmul.f32 %v640, %v896
      %v1025 = vmul.f32 %v641, %v897
      %v1026 = vmul.f32 %v642, %v898
      %v1027 = vmul.f32 %v643, %v899
      %v1028 = vmul.f32 %v644, %v900
      %v1029 = vmul.f32 %v645, %v901
      %v1030 = vmul.f32 %v646, %v902
      %v1031 = vmul.f32 %v647, %v903
      %v1032 = vmul.f32 %v648, %v904
      %v1033 = vmul.f32 %v649, %v905
      %v1034 = vmul.f32 %v650, %v906
      %v1035 = vmul.f32 %v651, %v907
      %v1036 = vmul.f32 %v652, %v908
      %v1037 = vmul.f32 %v653, %v909
      %v1038 = vmul.f32 %v654, %v910
      %v1039 = vmul.f32 %v655, %v911
      %v1040 = vmul.f32 %v656, %v912
      %v1041 = vmul.f32 %v657, %v913
      %v1042 = vmul.f32 %v658, %v914
      %v1043 = vmul.f32 %v659, %v915
      %v1044 = vmul.f32 %v660, %v916
      %v1045 = vmul.f32 %v661, %v917
      %v1046 = vmul.f32 %v662, %v918
      %v1047 = vmul.f32 %v663, %v919
      %v1048 = vmul.f32 %v664, %v920
      %v1049 = vmul.f32 %v665, %v921
      %v1050 = vmul.f32 %v666, %v922
      %v1051 = vmul.f32 %v667, %v923
      %v1052 = vmul.f32 %v668, %v924
      %v1053 = vmul.f32 %v669, %v925
      %v1054 = vmul.f32 %v670, %v926
      %v1055 = vmul.f32 %v671, %v927
      %v1056 = vmul.f32 %v672, %v928
      %v1057 = vmul.f32 %v673, %v929
      %v1058 = vmul.f32 %v674, %v930
      %v1059 = vmul.f32 %v675, %v931
      %v1060 = vmul.f32 %v676, %v932
      %v1061 = vmul.f32 %v677, %v933
      %v1062 = vmul.f32 %v678, %v934
      %v1063 = vmul.f32 %v679, %v935
      %v1064 = vmul.f32 %v680, %v936
      %v1065 = vmul.f32 %v681, %v937
      %v1066 = vmul.f32 %v682, %v938
      %v1067 = vmul.f32 %v683, %v939
      %v1068 = vmul.f32 %v684, %v940
      %v1069 = vmul.f32 %v685, %v941
      %v1070 = vmul.f32 %v686, %v942
      %v1071 = vmul.f32 %v687, %v943
      %v1072 = vmul.f32 %v688, %v944
      %v1073 = vmul.f32 %v689, %v945
      %v1074 = vmul.f32 %v690, %v946
      %v1075 = vmul.f32 %v691, %v947
      %v1076 = vmul.f32 %v692, %v948
      %v1077 = vmul.f32 %v693, %v949
      %v1078 = vmul.f32 %v694, %v950
      %v1079 = vmul.f32 %v695, %v951
      %v1080 = vmul.f32 %v696, %v952
      %v1081 = vmul.f32 %v697, %v953
      %v1082 = vmul.f32 %v698, %v954
      %v1083 = vmul.f32 %v699, %v955
      %v1084 = vmul.f32 %v700, %v956
      %v1085 = vmul.f32 %v701, %v957
      %v1086 = vmul.f32 %v702, %v958
      %v1087 = vmul.f32 %v703, %v959
      %v1088 = vmul.f32 %v704, %v960
      %v1089 = vmul.f32 %v705, %v961
      %v1090 = vmul.f32 %v706, %v962
      %v1091 = vmul.f32 %v707, %v963
      %v1092 = vmul.f32 %v708, %v964
      %v1093 = vmul.f32 %v709, %v965
      %v1094 = vmul.f32 %v710, %v966
      %v1095 = vmul.f32 %v711, %v967
      %v1096 = vmul.f32 %v712, %v968
      %v1097 = vmul.f32 %v713, %v969
      %v1098 = vmul.f32 %v714, %v970
      %v1099 = vmul.f32 %v715, %v971
      %v1100 = vmul.f32 %v716, %v972
      %v1101 = vmul.f32 %v717, %v973
      %v1102 = vmax.f32 %v974, 0.0
      %v1103 = vmax.f32 %v975, 0.0
      %v1104 = vmax.f32 %v976, 0.0
      %v1105 = vmax.f32 %v977, 0.0
      %v1106 = vmax.f32 %v978, 0.0
      %v1107 = vmax.f32 %v979, 0.0
      %v1108 = vmax.f32 %v980, 0.0
      %v1109 = vmax.f32 %v981, 0.0
      %v1110 = vmax.f32 %v982, 0.0
      %v1111 = vmax.f32 %v983, 0.0
      %v1112 = vmax.f32 %v984, 0.0
      %v1113 = vmax.f32 %v985, 0.0
      %v1114 = vmax.f32 %v986, 0.0
      %v1115 = vmax.f32 %v987, 0.0
      %v1116 = vmax.f32 %v988, 0.0
      %v1117 = vmax.f32 %v989, 0.0
      %v1118 = vmax.f32 %v990, 0.0
      %v1119 = vmax.f32 %v991, 0.0
      %v1120 = vmax.f32 %v992, 0.0
      %v1121 = vmax.f32 %v993, 0.0
      %v1122 = vmax.f32 %v994, 0.0
      %v1123 = vmax.f32 %v995, 0.0
      %v1124 = vmax.f32 %v996, 0.0
      %v1125 = vmax.f32 %v997, 0.0
      %v1126 = vmax.f32 %v998, 0.0
      %v1127 = vmax.f32 %v999, 0.0
      %v1128 = vmax.f32 %v1000, 0.0
      %v1129 = vmax.f32 %v1001, 0.0
      %v1130 = vmax.f32 %v1002, 0.0
      %v1131 = vmax.f32 %v1003, 0.0
      %v1132 = vmax.f32 %v1004, 0.0
      %v1133 = vmax.f32 %v1005, 0.0
      %v1134 = vmax.f32 %v1006, 0.0
      %v1135 = vmax.f32 %v1007, 0.0
      %v1136 = vmax.f32 %v1008, 0.0
      %v1137 = vmax.f32 %v1009, 0.0
      %v1138 = vmax.f32 %v1010, 0.0
      %v1139 = vmax.f32 %v1011, 0.0
      %v1140 = vmax.f32 %v1012, 0.0
      %v1141 = vmax.f32 %v1013, 0.0
      %v1142 = vmax.f32 %v1014, 0.0
      %v1143 = vmax.f32 %v1015, 0.0
      %v1144 = vmax.f32 %v1016, 0.0
      %v1145 = vmax.f32 %v1017, 0.0
      %v1146 = vmax.f32 %v1018, 0.0
      %v1147 = vmax.f32 %v1019, 0.0
      %v1148 = vmax.f32 %v1020, 0.0
      %v1149 = vmax.f32 %v1021, 0.0
      %v1150 = vmax.f32 %v1022, 0.0
      %v1151 = vmax.f32 %v1023, 0.0
      %v1152 = vmax.f32 %v1024, 0.0
      %v1153 = vmax.f32 %v1025, 0.0
      %v1154 = vmax.f32 %v1026, 0.0
      %v1155 = vmax.f32 %v1027, 0.0
      %v1156 = vmax.f32 %v1028, 0.0
      %v1157 = vmax.f32 %v1029, 0.0
      %v1158 = vmax.f32 %v1030, 0.0
      %v1159 = vmax.f32 %v1031, 0.0
      %v1160 = vmax.f32 %v1032, 0.0
      %v1161 = vmax.f32 %v1033, 0.0
      %v1162 = vmax.f32 %v1034, 0.0
      %v1163 = vmax.f32 %v1035, 0.0
      %v1164 = vmax.f32 %v1036, 0.0
      %v1165 = vmax.f32 %v1037, 0.0
      %v1166 = vmax.f32 %v1038, 0.0
      %v1167 = vmax.f32 %v1039, 0.0
      %v1168 = vmax.f32 %v1040, 0.0
      %v1169 = vmax.f32 %v1041, 0.0
      %v1170 = vmax.f32 %v1042, 0.0
      %v1171 = vmax.f32 %v1043, 0.0
      %v1172 = vmax.f32 %v1044, 0.0
      %v1173 = vmax.f32 %v1045, 0.0
      %v1174 = vmax.f32 %v1046, 0.0
      %v1175 = vmax.f32 %v1047, 0.0
      %v1176 = vmax.f32 %v1048, 0.0
      %v1177 = vmax.f32 %v1049, 0.0
      %v1178 = vmax.f32 %v1050, 0.0
      %v1179 = vmax.f32 %v1051, 0.0
      %v1180 = vmax.f32 %v1052, 0.0
      %v1181 = vmax.f32 %v1053, 0.0
      %v1182 = vmax.f32 %v1054, 0.0
      %v1183 = vmax.f32 %v1055, 0.0
      %v1184 = vmax.f32 %v1056, 0.0
      %v1185 = vmax.f32 %v1057, 0.0
      %v1186 = vmax.f32 %v1058, 0.0
      %v1187 = vmax.f32 %v1059, 0.0
      %v1188 = vmax.f32 %v1060, 0.0
      %v1189 = vmax.f32 %v1061, 0.0
      %v1190 = vmax.f32 %v1062, 0.0
      %v1191 = vmax.f32 %v1063, 0.0
      %v1192 = vmax.f32 %v1064, 0.0
      %v1193 = vmax.f32 %v1065, 0.0
      %v1194 = vmax.f32 %v1066, 0.0
      %v1195 = vmax.f32 %v1067, 0.0
      %v1196 = vmax.f32 %v1068, 0.0
      %v1197 = vmax.f32 %v1069, 0.0
      %v1198 = vmax.f32 %v1070, 0.0
      %v1199 = vmax.f32 %v1071, 0.0
      %v1200 = vmax.f32 %v1072, 0.0
      %v1201 = vmax.f32 %v1073, 0.0
      %v1202 = vmax.f32 %v1074, 0.0
      %v1203 = vmax.f32 %v1075, 0.0
      %v1204 = vmax.f32 %v1076, 0.0
      %v1205 = vmax.f32 %v1077, 0.0
      %v1206 = vmax.f32 %v1078, 0.0
      %v1207 = vmax.f32 %v1079, 0.0
      %v1208 = vmax.f32 %v1080, 0.0
      %v1209 = vmax.f32 %v1081, 0.0
      %v1210 = vmax.f32 %v1082, 0.0
      %v1211 = vmax.f32 %v1083, 0.0
      %v1212 = vmax.f32 %v1084, 0.0
      %v1213 = vmax.f32 %v1085, 0.0
      %v1214 = vmax.f32 %v1086, 0.0
      %v1215 = vmax.f32 %v1087, 0.0
      %v1216 = vmax.f32 %v1088, 0.0
      %v1217 = vmax.f32 %v1089, 0.0
      %v1218 = vmax.f32 %v1090, 0.0
      %v1219 = vmax.f32 %v1091, 0.0
      %v1220 = vmax.f32 %v1092, 0.0
      %v1221 = vmax.f32 %v1093, 0.0
      %v1222 = vmax.f32 %v1094, 0.0
      %v1223 = vmax.f32 %v1095, 0.0
      %v1224 = vmax.f32 %v1096, 0.0
      %v1225 = vmax.f32 %v1097, 0.0
      %v1226 = vmax.f32 %v1098, 0.0
      %v1227 = vmax.f32 %v1099, 0.0
      %v1228 = vmax.f32 %v1100, 0.0
      %v1229 = vmax.f32 %v1101, 0.0
      %1230 = vst [vmem:[%s194] sm:$0xff] %v1102
      %1231 = vst [vmem:[%s194 + $0x8] sm:$0xff] %v1103
      %1232 = vst [vmem:[%s194 + $0x10] sm:$0xff] %v1104
      %1233 = vst [vmem:[%s194 + $0x18] sm:$0xff] %v1105
      %1234 = vst [vmem:[%s194 + $0x20] sm:$0xff] %v1106
      %1235 = vst [vmem:[%s194 + $0x28] sm:$0xff] %v1107
      %1236 = vst [vmem:[%s194 + $0x30] sm:$0xff] %v1108
      %1237 = vst [vmem:[%s194 + $0x38] sm:$0xff] %v1109
      %1238 = vst [vmem:[%s194 + $0x40] sm:$0xff] %v1110
      %1239 = vst [vmem:[%s194 + $0x48] sm:$0xff] %v1111
      %1240 = vst [vmem:[%s194 + $0x50] sm:$0xff] %v1112
      %1241 = vst [vmem:[%s194 + $0x58] sm:$0xff] %v1113
      %1242 = vst [vmem:[%s194 + $0x60] sm:$0xff] %v1114
      %1243 = vst [vmem:[%s194 + $0x68] sm:$0xff] %v1115
      %1244 = vst [vmem:[%s194 + $0x70] sm:$0xff] %v1116
      %1245 = vst [vmem:[%s194 + $0x78] sm:$0xff] %v1117
      %1246 = vst [vmem:[%s194 + $0x80] sm:$0xff] %v1118
      %1247 = vst [vmem:[%s194 + $0x88] sm:$0xff] %v1119
      %1248 = vst [vmem:[%s194 + $0x90] sm:$0xff] %v1120
      %1249 = vst [vmem:[%s194 + $0x98] sm:$0xff] %v1121
      %1250 = vst [vmem:[%s194 + $0xa0] sm:$0xff] %v1122
      %1251 = vst [vmem:[%s194 + $0xa8] sm:$0xff] %v1123
      %1252 = vst [vmem:[%s194 + $0xb0] sm:$0xff] %v1124
      %1253 = vst [vmem:[%s194 + $0xb8] sm:$0xff] %v1125
      %1254 = vst [vmem:[%s194 + $0xc0] sm:$0xff] %v1126
      %1255 = vst [vmem:[%s194 + $0xc8] sm:$0xff] %v1127
      %1256 = vst [vmem:[%s194 + $0xd0] sm:$0xff] %v1128
      %1257 = vst [vmem:[%s194 + $0xd8] sm:$0xff] %v1129
      %1258 = vst [vmem:[%s194 + $0xe0] sm:$0xff] %v1130
      %1259 = vst [vmem:[%s194 + $0xe8] sm:$0xff] %v1131
      %1260 = vst [vmem:[%s194 + $0xf0] sm:$0xff] %v1132
      %1261 = vst [vmem:[%s194 + $0xf8] sm:$0xff] %v1133
      %1262 = vst [vmem:[%s194 + $0x100] sm:$0xff] %v1134
      %1263 = vst [vmem:[%s194 + $0x108] sm:$0xff] %v1135
      %1264 = vst [vmem:[%s194 + $0x110] sm:$0xff] %v1136
      %1265 = vst [vmem:[%s194 + $0x118] sm:$0xff] %v1137
      %1266 = vst [vmem:[%s194 + $0x120] sm:$0xff] %v1138
      %1267 = vst [vmem:[%s194 + $0x128] sm:$0xff] %v1139
      %1268 = vst [vmem:[%s194 + $0x130] sm:$0xff] %v1140
      %1269 = vst [vmem:[%s194 + $0x138] sm:$0xff] %v1141
      %1270 = vst [vmem:[%s194 + $0x140] sm:$0xff] %v1142
      %1271 = vst [vmem:[%s194 + $0x148] sm:$0xff] %v1143
      %1272 = vst [vmem:[%s194 + $0x150] sm:$0xff] %v1144
      %1273 = vst [vmem:[%s194 + $0x158] sm:$0xff] %v1145
      %1274 = vst [vmem:[%s194 + $0x160] sm:$0xff] %v1146
      %1275 = vst [vmem:[%s194 + $0x168] sm:$0xff] %v1147
      %1276 = vst [vmem:[%s194 + $0x170] sm:$0xff] %v1148
      %1277 = vst [vmem:[%s194 + $0x178] sm:$0xff] %v1149
      %1278 = vst [vmem:[%s194 + $0x180] sm:$0xff] %v1150
      %1279 = vst [vmem:[%s194 + $0x188] sm:$0xff] %v1151
      %1280 = vst [vmem:[%s194 + $0x190] sm:$0xff] %v1152
      %1281 = vst [vmem:[%s194 + $0x198] sm:$0xff] %v1153
      %1282 = vst [vmem:[%s194 + $0x1a0] sm:$0xff] %v1154
      %1283 = vst [vmem:[%s194 + $0x1a8] sm:$0xff] %v1155
      %1284 = vst [vmem:[%s194 + $0x1b0] sm:$0xff] %v1156
      %1285 = vst [vmem:[%s194 + $0x1b8] sm:$0xff] %v1157
      %1286 = vst [vmem:[%s194 + $0x1c0] sm:$0xff] %v1158
      %1287 = vst [vmem:[%s194 + $0x1c8] sm:$0xff] %v1159
      %1288 = vst [vmem:[%s194 + $0x1d0] sm:$0xff] %v1160
      %1289 = vst [vmem:[%s194 + $0x1d8] sm:$0xff] %v1161
      %1290 = vst [vmem:[%s194 + $0x1e0] sm:$0xff] %v1162
      %1291 = vst [vmem:[%s194 + $0x1e8] sm:$0xff] %v1163
      %1292 = vst [vmem:[%s194 + $0x1f0] sm:$0xff] %v1164
      %1293 = vst [vmem:[%s194 + $0x1f8] sm:$0xff] %v1165
      %1294 = vst [vmem:[%s194 + $0x200] sm:$0xff] %v1166
      %1295 = vst [vmem:[%s194 + $0x208] sm:$0xff] %v1167
      %1296 = vst [vmem:[%s194 + $0x210] sm:$0xff] %v1168
      %1297 = vst [vmem:[%s194 + $0x218] sm:$0xff] %v1169
      %1298 = vst [vmem:[%s194 + $0x220] sm:$0xff] %v1170
      %1299 = vst [vmem:[%s194 + $0x228] sm:$0xff] %v1171
      %1300 = vst [vmem:[%s194 + $0x230] sm:$0xff] %v1172
      %1301 = vst [vmem:[%s194 + $0x238] sm:$0xff] %v1173
      %1302 = vst [vmem:[%s194 + $0x240] sm:$0xff] %v1174
      %1303 = vst [vmem:[%s194 + $0x248] sm:$0xff] %v1175
      %1304 = vst [vmem:[%s194 + $0x250] sm:$0xff] %v1176
      %1305 = vst [vmem:[%s194 + $0x258] sm:$0xff] %v1177
      %1306 = vst [vmem:[%s194 + $0x260] sm:$0xff] %v1178
      %1307 = vst [vmem:[%s194 + $0x268] sm:$0xff] %v1179
      %1308 = vst [vmem:[%s194 + $0x270] sm:$0xff] %v1180
      %1309 = vst [vmem:[%s194 + $0x278] sm:$0xff] %v1181
      %1310 = vst [vmem:[%s194 + $0x280] sm:$0xff] %v1182
      %1311 = vst [vmem:[%s194 + $0x288] sm:$0xff] %v1183
      %1312 = vst [vmem:[%s194 + $0x290] sm:$0xff] %v1184
      %1313 = vst [vmem:[%s194 + $0x298] sm:$0xff] %v1185
      %1314 = vst [vmem:[%s194 + $0x2a0] sm:$0xff] %v1186
      %1315 = vst [vmem:[%s194 + $0x2a8] sm:$0xff] %v1187
      %1316 = vst [vmem:[%s194 + $0x2b0] sm:$0xff] %v1188
      %1317 = vst [vmem:[%s194 + $0x2b8] sm:$0xff] %v1189
      %1318 = vst [vmem:[%s194 + $0x2c0] sm:$0xff] %v1190
      %1319 = vst [vmem:[%s194 + $0x2c8] sm:$0xff] %v1191
      %1320 = vst [vmem:[%s194 + $0x2d0] sm:$0xff] %v1192
      %1321 = vst [vmem:[%s194 + $0x2d8] sm:$0xff] %v1193
      %1322 = vst [vmem:[%s194 + $0x2e0] sm:$0xff] %v1194
      %1323 = vst [vmem:[%s194 + $0x2e8] sm:$0xff] %v1195
      %1324 = vst [vmem:[%s194 + $0x2f0] sm:$0xff] %v1196
      %1325 = vst [vmem:[%s194 + $0x2f8] sm:$0xff] %v1197
      %1326 = vst [vmem:[%s194 + $0x300] sm:$0xff] %v1198
      %1327 = vst [vmem:[%s194 + $0x308] sm:$0xff] %v1199
      %1328 = vst [vmem:[%s194 + $0x310] sm:$0xff] %v1200
      %1329 = vst [vmem:[%s194 + $0x318] sm:$0xff] %v1201
      %1330 = vst [vmem:[%s194 + $0x320] sm:$0xff] %v1202
      %1331 = vst [vmem:[%s194 + $0x328] sm:$0xff] %v1203
      %1332 = vst [vmem:[%s194 + $0x330] sm:$0xff] %v1204
      %1333 = vst [vmem:[%s194 + $0x338] sm:$0xff] %v1205
      %1334 = vst [vmem:[%s194 + $0x340] sm:$0xff] %v1206
      %1335 = vst [vmem:[%s194 + $0x348] sm:$0xff] %v1207
      %1336 = vst [vmem:[%s194 + $0x350] sm:$0xff] %v1208
      %1337 = vst [vmem:[%s194 + $0x358] sm:$0xff] %v1209
      %1338 = vst [vmem:[%s194 + $0x360] sm:$0xff] %v1210
      %1339 = vst [vmem:[%s194 + $0x368] sm:$0xff] %v1211
      %1340 = vst [vmem:[%s194 + $0x370] sm:$0xff] %v1212
      %1341 = vst [vmem:[%s194 + $0x378] sm:$0xff] %v1213
      %1342 = vst [vmem:[%s194 + $0x380] sm:$0xff] %v1214
      %1343 = vst [vmem:[%s194 + $0x388] sm:$0xff] %v1215
      %1344 = vst [vmem:[%s194 + $0x390] sm:$0xff] %v1216
      %1345 = vst [vmem:[%s194 + $0x398] sm:$0xff] %v1217
      %1346 = vst [vmem:[%s194 + $0x3a0] sm:$0xff] %v1218
      %1347 = vst [vmem:[%s194 + $0x3a8] sm:$0xff] %v1219
      %1348 = vst [vmem:[%s194 + $0x3b0] sm:$0xff] %v1220
      %1349 = vst [vmem:[%s194 + $0x3b8] sm:$0xff] %v1221
      %1350 = vst [vmem:[%s194 + $0x3c0] sm:$0xff] %v1222
      %1351 = vst [vmem:[%s194 + $0x3c8] sm:$0xff] %v1223
      %1352 = vst [vmem:[%s194 + $0x3d0] sm:$0xff] %v1224
      %1353 = vst [vmem:[%s194 + $0x3d8] sm:$0xff] %v1225
      %1354 = vst [vmem:[%s194 + $0x3e0] sm:$0xff] %v1226
      %1355 = vst [vmem:[%s194 + $0x3e8] sm:$0xff] %v1227
      %1356 = vst [vmem:[%s194 + $0x3f0] sm:$0xff] %v1228
      %1357 = vst [vmem:[%s194 + $0x3f8] sm:$0xff] %v1229
      %s1358 = smul.u32 128, %s14
      %p1359 = scmp.lt.s32.totalorder %s1358, 255
      %s1360 = scalar_select %p1359, %s1358, 255
      %s1361 = smul.addr %s1360, 8
      %s1362 = scalar_lea.vmem %s3, %s1361
      // Predicated region
      $region33: #{pix2pix_decoder_block.3} parent=31 // pred_check
        %p1363 = pneg %p105
      $region34: #{pix2pix_decoder_block.3} parent=31 // pred_check_branch
        %1365 = sbr.rel (%p1363) target = $region36
      $region35: #{pix2pix_decoder_block.3} parent=31 // pred_region
        %s1366 = smul.u32 128, %s14
      $region36: #{pix2pix_decoder_block.3} parent=31 // pred_fallthru
        _
    $region32: #{pix2pix_decoder_block.3} parent=5 // pred_fallthru
      _
    %p1367 = scmp.le.s32.totalorder 2, %s9
    // Predicated region
    $region37: #{pix2pix_decoder_block.3} parent=5 // pred_check
      %p1368 = pneg %p1367
    $region38: #{pix2pix_decoder_block.3} parent=5 // pred_check_branch
      %1370 = sbr.rel (%p1368) target = $region40
    $region39: #{pix2pix_decoder_block.3} parent=5 // pred_region
      %s1371 = ssub.s32 %s9, 2
      // Predicated region
      $region41: #{pix2pix_decoder_block.3} parent=39 // pred_check
        %p1372 = pneg %p111
      $region42: #{pix2pix_decoder_block.3} parent=39 // pred_check_branch
        %1374 = sbr.rel (%p1372) target = $region44
      $region43: #{pix2pix_decoder_block.3} parent=39 // pred_region
        %s1375 = smul.u32 128, %s15
        %p1376 = scmp.lt.s32.totalorder %s1375, 255
        %s1377 = scalar_select %p1376, %s1375, 255
        %s1378 = smul.addr %s1377, 8
        %s1379 = scalar_lea.vmem %s3, %s1378
      $region44: #{pix2pix_decoder_block.3} parent=39 // pred_fallthru
        _
    $region40: #{pix2pix_decoder_block.3} parent=5 // pred_fallthru
      _
  $region6: #{pix2pix_decoder_block.3} parent=0 // loop_footer
    %s13 = sadd.s32 1, %s9
  $region7: #{pix2pix_decoder_block.3} parent=0 // loop_footer_branch
    %8 = sbr.rel target = $region3
  $region8: #{pix2pix_decoder_block.3} parent=0 // loop_exit
    _

</llo_original>
